<compile_context>
chip_gen: v5e
topology: v5e:2x2
jax: 0.10.0
libtpu: 0.0.40
codegen_flags: <defaults>
</compile_context>

<pallas_src>
import functools

import jax
import jax.numpy as jnp
from jax.experimental import pallas as pl
from jax.experimental.pallas import tpu as pltpu

LANE = 128  # TPU lane width; fc4 hidden / fc5 output / D are padded to this.
# Bias-bundle lane offsets for fc1..fc5 (padded widths 512/256/128/128/128).
_B_OFFS = (0, 512, 768, 896, 1024, 1152)


def _round_up(x, m):
    return (x + m - 1) // m * m


@functools.lru_cache(maxsize=None)
def _vmem_cap_bytes():
    """Physical VMEM per TensorCore; conservative 64 MiB fallback (v7x)."""
    try:
        return int(pltpu.get_tpu_info().vmem_capacity_bytes)
    except Exception:
        return 64 << 20


# ----------------------------- Pallas kernel --------------------------------
def sn_mlp_kernel(x_ref,
                  w1_ref, w2_ref, w3_ref, w4_ref, w5_ref,
                  b_ref,
                  out_ref):
    """Fused 5-layer MLP (BatchNorm pre-folded into fc1).

    x arrives as f32 (cast to bf16 here, in VMEM); bf16 matmul inputs,
    f32 accumulation; one bundled f32 bias operand, sliced statically.
    """
    h = x_ref[...].astype(jnp.bfloat16)                       # f32 -> bf16 in VMEM
    # fc1: (TB, D_pad) @ (D_pad, 512) + b1 -> ReLU
    h = jnp.dot(h, w1_ref[...],
                preferred_element_type=jnp.float32) + b_ref[:, _B_OFFS[0]:_B_OFFS[1]]
    h = jnp.maximum(h, 0.0).astype(jnp.bfloat16)
    # fc2: 512 -> 256
    h = jnp.dot(h, w2_ref[...],
                preferred_element_type=jnp.float32) + b_ref[:, _B_OFFS[1]:_B_OFFS[2]]
    h = jnp.maximum(h, 0.0).astype(jnp.bfloat16)
    # fc3: 256 -> 128
    h = jnp.dot(h, w3_ref[...],
                preferred_element_type=jnp.float32) + b_ref[:, _B_OFFS[2]:_B_OFFS[3]]
    h = jnp.maximum(h, 0.0).astype(jnp.bfloat16)
    # fc4: 128 -> 128 (64 real + 64 zero-padded lanes)
    h = jnp.dot(h, w4_ref[...],
                preferred_element_type=jnp.float32) + b_ref[:, _B_OFFS[3]:_B_OFFS[4]]
    h = jnp.maximum(h, 0.0).astype(jnp.bfloat16)
    # fc5: 128 -> 128 (num_classes real + zero-padded lanes), lane-dense store
    out_ref[...] = jnp.dot(h, w5_ref[...],
                           preferred_element_type=jnp.float32) + b_ref[:, _B_OFFS[4]:_B_OFFS[5]]


# --------------------------- parameter handling ------------------------------
def make_params(key, n_coefficients, M, N, num_classes):
    """Deterministic f32 parameters mirroring PyTorch default shapes/init."""
    C = 3 * n_coefficients
    D = C * M * N
    dims = [D, 512, 256, 128, 64, num_classes]
    params = {
        # BatchNorm2d(C) defaults: gamma=1, beta=0, running_mean=0, running_var=1
        "bn_gamma": jnp.ones((C,), jnp.float32),
        "bn_beta": jnp.zeros((C,), jnp.float32),
        "bn_mean": jnp.zeros((C,), jnp.float32),
        "bn_var": jnp.ones((C,), jnp.float32),
    }
    keys = jax.random.split(key, 2 * (len(dims) - 1))
    for i in range(len(dims) - 1):
        fan_in, fan_out = dims[i], dims[i + 1]
        bound = 1.0 / jnp.sqrt(jnp.float32(fan_in))
        params[f"w{i + 1}"] = jax.random.uniform(
            keys[2 * i], (fan_in, fan_out), jnp.float32, -bound, bound)
        params[f"b{i + 1}"] = jax.random.uniform(
            keys[2 * i + 1], (1, fan_out), jnp.float32, -bound, bound)
    return params


def fold_and_pack_params(params, H, W, eps=1e-5):
    """Fold eval-mode BN into fc1; pad D/fc4/fc5 to 128 lanes; bundle biases."""
    HW = H * W
    scale_c = params["bn_gamma"] / jnp.sqrt(params["bn_var"] + eps)   # (C,)
    shift_c = params["bn_beta"] - params["bn_mean"] * scale_c         # (C,)
    scale_flat = jnp.repeat(scale_c, HW)                              # (D,)
    shift_flat = jnp.repeat(shift_c, HW)                              # (D,)

    # Exact fold in f32, then quantize the folded weight.
    w1 = params["w1"] * scale_flat[:, None]                           # (D, 512)
    b1 = params["b1"] + shift_flat[None, :] @ params["w1"]            # (1, 512)

    # Pad fc1 fan-in up to a lane multiple (zero rows -> exact, lane-dense DMA).
    D = w1.shape[0]
    D_pad = _round_up(D, LANE)
    if D_pad != D:
        w1 = jnp.pad(w1, ((0, D_pad - D), (0, 0)))

    # Pad fc4 output 64 -> 128 cols (zero) and fc5 64 -> 128 rows,
    # num_classes -> 128 cols (zero); exact because ReLU(0)=0 and padded w5
    # rows/cols are zero, and the output is sliced back to num_classes.
    w4 = jnp.pad(params["w4"], ((0, 0), (0, LANE - params["w4"].shape[1])))
    b4 = jnp.pad(params["b4"], ((0, 0), (0, LANE - params["b4"].shape[1])))
    w5 = jnp.pad(params["w5"], ((0, LANE - params["w5"].shape[0]),
                                (0, LANE - params["w5"].shape[1])))
    b5 = jnp.pad(params["b5"], ((0, 0), (0, LANE - params["b5"].shape[1])))

    # Bundle all biases into one (1, 1152) f32 operand (single tiny DMA).
    b_all = jnp.concatenate(
        [b1, params["b2"], params["b3"], b4, b5], axis=1).astype(jnp.float32)
    assert b_all.shape[1] == _B_OFFS[-1], b_all.shape

    return {
        "w1": w1.astype(jnp.bfloat16),
        "w2": params["w2"].astype(jnp.bfloat16),
        "w3": params["w3"].astype(jnp.bfloat16),
        "w4": w4.astype(jnp.bfloat16),
        "w5": w5.astype(jnp.bfloat16),
        "b_all": b_all,
    }


# ----------------------------- Python wrapper --------------------------------
@functools.partial(jax.jit, static_argnames=("num_classes",))
def sn_mlp_forward(x_nchw, packed, num_classes=10):
    B, C, H, W = x_nchw.shape
    D = C * H * W
    D_pad = packed["w1"].shape[0]          # D rounded up to a lane multiple

    # x.view(B, -1); stays f32 -> the bf16 cast happens inside the kernel,
    # halving the HBM traffic on the dominant array vs a wrapper-side cast.
    x_flat = x_nchw.reshape(B, D)
    if D_pad != D:
        x_flat = jnp.pad(x_flat, ((0, 0), (0, D_pad - D)))

    # Batch tiling: pad B so every block is full (16 keeps bf16 sublane
    # packing of the intermediates clean); 256-row tiles fill the MXU on
    # v6e/v7x and amortize per-grid-step pipeline overhead.
    b_pad = _round_up(max(B, 16), 16)
    tile_b = min(256, b_pad)
    b_pad = _round_up(b_pad, tile_b)
    if b_pad != B:
        x_flat = jnp.pad(x_flat, ((0, b_pad - B), (0, 0)))
    n_tiles = b_pad // tile_b

    ops = [packed[k] for k in ("w1", "w2", "w3", "w4", "w5", "b_all")]

    def resident(i):                        # weights/biases: same block always
        return (0, 0)

    # Invariant operands are single-buffered (no re-fetch, half the VMEM).
    in_specs = [pl.BlockSpec((tile_b, D_pad), lambda i: (i, 0))] + [
        pl.BlockSpec(op.shape, resident, pipeline_mode=pl.Buffered(1))
        for op in ops
    ]
    out_spec = pl.BlockSpec((tile_b, LANE), lambda i: (i, 0))

    # Advisory cost hint for the XLA scheduler (x read once in f32).
    flops = 2 * b_pad * (D_pad * 512 + 512 * 256 + 256 * 128
                         + 128 * 128 + 128 * 128)
    weight_bytes = sum(int(o.size) * o.dtype.itemsize for o in ops)
    bytes_accessed = b_pad * D_pad * 4 + weight_bytes + b_pad * LANE * 4
    cost = pl.CostEstimate(flops=flops, transcendentals=0,
                           bytes_accessed=bytes_accessed)

    # VMEM budget: single-buffered weights + double-buffered f32 x / f32 out
    # tiles + headroom, capped below the physical per-core VMEM.
    tile_bytes = 2 * (tile_b * D_pad * 4 + tile_b * LANE * 4)
    cap = _vmem_cap_bytes() - (8 << 20)
    vmem_limit = int(max(min(weight_bytes + tile_bytes + (8 << 20), cap),
                         16 << 20))

    out_padded = pl.pallas_call(
        sn_mlp_kernel,
        out_shape=jax.ShapeDtypeStruct((b_pad, LANE), jnp.float32),
        grid=(n_tiles,),
        in_specs=in_specs,
        out_specs=out_spec,
        compiler_params=pltpu.CompilerParams(
            dimension_semantics=("parallel",),   # v7x: 2 TCs split batch tiles
            vmem_limit_bytes=vmem_limit),
        cost_estimate=cost,
    )(x_flat, *ops)

    return out_padded[:B, :num_classes]


# ------------------------------- references ----------------------------------
def sn_mlp_reference_bf16(x_nchw, packed, num_classes=10):
    """Mirrors the kernel arithmetic exactly (bf16 matmuls, f32 accum)."""
    B = x_nchw.shape[0]
    D_pad = packed["w1"].shape[0]
    h = x_nchw.reshape(B, -1)
    if h.shape[1] != D_pad:
        h = jnp.pad(h, ((0, 0), (0, D_pad - h.shape[1])))
    h = h.astype(jnp.bfloat16)
    for i in range(1, 6):
        b = packed["b_all"][:, _B_OFFS[i - 1]:_B_OFFS[i]]
        h = jnp.dot(h, packed[f"w{i}"],
                    preferred_element_type=jnp.float32) + b
        if i < 5:
            h = jnp.maximum(h, 0.0).astype(jnp.bfloat16)
    return h[:, :num_classes]


def sn_mlp_reference_f32(x_nchw, params, num_classes=10):
    """Full-precision PyTorch-semantics reference (eval-mode BatchNorm)."""
    B, C, H, W = x_nchw.shape
    eps = 1e-5
    scale_c = params["bn_gamma"] / jnp.sqrt(params["bn_var"] + eps)
    shift_c = params["bn_beta"] - params["bn_mean"] * scale_c
    xn = x_nchw * scale_c[None, :, None, None] + shift_c[None, :, None, None]
    h = xn.reshape(B, -1)
    for i in range(1, 6):
        h = h @ params[f"w{i}"] + params[f"b{i}"]
        if i < 5:
            h = jnp.maximum(h, 0.0)
    return h[:, :num_classes]


if __name__ == "__main__":
    # Small shapes consistent with the module's forward:
    #   batch=8, n_coefficients=4 -> C = 3*4 = 12, M = N = 8
    #   flattened in_features = 3 * 4 * 8 * 8 = 768, num_classes = 10
    B, n_coeff, M, N, num_classes = 8, 4, 8, 8, 10
    C = 3 * n_coeff

    x = jax.random.normal(jax.random.PRNGKey(0), (B, C, M, N), jnp.float32)
    params = make_params(jax.random.PRNGKey(42), n_coeff, M, N, num_classes)
    packed = fold_and_pack_params(params, M, N)

    out = sn_mlp_forward(x, packed, num_classes=num_classes)
    out = jax.block_until_ready(out)

    ref_bf16 = sn_mlp_reference_bf16(x, packed, num_classes=num_classes)
    ref_f32 = sn_mlp_reference_f32(x, params, num_classes=num_classes)

    assert out.shape == (B, num_classes), out.shape
    # Tight check against the kernel-equivalent bf16/f32-accum arithmetic.
    assert jnp.allclose(out, ref_bf16, atol=2e-3, rtol=2e-3), \
        "mismatch vs bf16 reference"
    # Loose check against the full-precision semantics (bf16 quantization drift).
    assert jnp.allclose(out, ref_f32, atol=1e-1, rtol=1e-1), \
        "mismatch vs f32 reference"

    print("KERNEL_OK")
</pallas_src>

<mosaic_0001>
module attributes {stable_mosaic.version = 11 : i64} {
  func.func @sn_mlp_kernel(%arg0: i32, %arg1: memref<16x768xf32, #tpu.memory_space<vmem>>, %arg2: memref<768x512xbf16, #tpu.memory_space<vmem>>, %arg3: memref<512x256xbf16, #tpu.memory_space<vmem>>, %arg4: memref<256x128xbf16, #tpu.memory_space<vmem>>, %arg5: memref<128x128xbf16, #tpu.memory_space<vmem>>, %arg6: memref<128x128xbf16, #tpu.memory_space<vmem>>, %arg7: memref<1x1152xf32, #tpu.memory_space<vmem>>, %arg8: memref<16x128xf32, #tpu.memory_space<vmem>>) attributes {dimension_semantics = [#tpu.dimension_semantics<parallel>], iteration_bounds = array<i64: 1>, scalar_prefetch = 0 : i64, scratch_operands = 0 : i64, tpu.core_type = #tpu.core_type<tc>, window_params = [{transform_indices = @transform_0, window_bounds = array<i64: 16, 768>}, {pipeline_mode = #tpu.pipeline_mode<synchronous>, transform_indices = @transform_1, window_bounds = array<i64: 768, 512>}, {pipeline_mode = #tpu.pipeline_mode<synchronous>, transform_indices = @transform_2, window_bounds = array<i64: 512, 256>}, {pipeline_mode = #tpu.pipeline_mode<synchronous>, transform_indices = @transform_3, window_bounds = array<i64: 256, 128>}, {pipeline_mode = #tpu.pipeline_mode<synchronous>, transform_indices = @transform_4, window_bounds = array<i64: 128, 128>}, {pipeline_mode = #tpu.pipeline_mode<synchronous>, transform_indices = @transform_5, window_bounds = array<i64: 128, 128>}, {pipeline_mode = #tpu.pipeline_mode<synchronous>, transform_indices = @transform_6, window_bounds = array<i64: 1, 1152>}, {transform_indices = @transform_7, window_bounds = array<i64: 16, 128>}]} {
    %c0 = arith.constant 0 : index
    %c0_0 = arith.constant 0 : index
    %0 = vector.load %arg1[%c0, %c0_0] : memref<16x768xf32, #tpu.memory_space<vmem>>, vector<16x768xf32>
    %1 = arith.truncf %0 : vector<16x768xf32> to vector<16x768xbf16>
    %c0_1 = arith.constant 0 : index
    %c0_2 = arith.constant 0 : index
    %2 = vector.load %arg2[%c0_1, %c0_2] : memref<768x512xbf16, #tpu.memory_space<vmem>>, vector<768x512xbf16>
    %cst = arith.constant dense<0.000000e+00> : vector<16x512xf32>
    %3 = tpu.matmul %1, %2, %cst {dimension_numbers = #tpu.dot_dimension_numbers<[1], [0], [0], [1], [0, 0, 1, 1], [], []>} : vector<16x768xbf16>, vector<768x512xbf16>, vector<16x512xf32> -> vector<16x512xf32>
    %c0_3 = arith.constant 0 : index
    %c0_4 = arith.constant 0 : index
    %4 = vector.load %arg7[%c0_3, %c0_4] : memref<1x1152xf32, #tpu.memory_space<vmem>>, vector<1x512xf32>
    %5 = vector.broadcast %4 : vector<1x512xf32> to vector<16x512xf32>
    %6 = arith.addf %3, %5 : vector<16x512xf32>
    %cst_5 = arith.constant 0.000000e+00 : f32
    %7 = vector.broadcast %cst_5 : f32 to vector<16x512xf32>
    %8 = arith.maximumf %6, %7 : vector<16x512xf32>
    %9 = arith.truncf %8 : vector<16x512xf32> to vector<16x512xbf16>
    %c0_6 = arith.constant 0 : index
    %c0_7 = arith.constant 0 : index
    %10 = vector.load %arg3[%c0_6, %c0_7] : memref<512x256xbf16, #tpu.memory_space<vmem>>, vector<512x256xbf16>
    %cst_8 = arith.constant dense<0.000000e+00> : vector<16x256xf32>
    %11 = tpu.matmul %9, %10, %cst_8 {dimension_numbers = #tpu.dot_dimension_numbers<[1], [0], [0], [1], [0, 0, 1, 1], [], []>} : vector<16x512xbf16>, vector<512x256xbf16>, vector<16x256xf32> -> vector<16x256xf32>
    %c0_9 = arith.constant 0 : index
    %c512 = arith.constant 512 : index
    %12 = vector.load %arg7[%c0_9, %c512] : memref<1x1152xf32, #tpu.memory_space<vmem>>, vector<1x256xf32>
    %13 = vector.broadcast %12 : vector<1x256xf32> to vector<16x256xf32>
    %14 = arith.addf %11, %13 : vector<16x256xf32>
    %cst_10 = arith.constant 0.000000e+00 : f32
    %15 = vector.broadcast %cst_10 : f32 to vector<16x256xf32>
    %16 = arith.maximumf %14, %15 : vector<16x256xf32>
    %17 = arith.truncf %16 : vector<16x256xf32> to vector<16x256xbf16>
    %c0_11 = arith.constant 0 : index
    %c0_12 = arith.constant 0 : index
    %18 = vector.load %arg4[%c0_11, %c0_12] : memref<256x128xbf16, #tpu.memory_space<vmem>>, vector<256x128xbf16>
    %cst_13 = arith.constant dense<0.000000e+00> : vector<16x128xf32>
    %19 = tpu.matmul %17, %18, %cst_13 {dimension_numbers = #tpu.dot_dimension_numbers<[1], [0], [0], [1], [0, 0, 1, 1], [], []>} : vector<16x256xbf16>, vector<256x128xbf16>, vector<16x128xf32> -> vector<16x128xf32>
    %c0_14 = arith.constant 0 : index
    %c768 = arith.constant 768 : index
    %20 = vector.load %arg7[%c0_14, %c768] : memref<1x1152xf32, #tpu.memory_space<vmem>>, vector<1x128xf32>
    %21 = vector.broadcast %20 : vector<1x128xf32> to vector<16x128xf32>
    %22 = arith.addf %19, %21 : vector<16x128xf32>
    %cst_15 = arith.constant 0.000000e+00 : f32
    %23 = vector.broadcast %cst_15 : f32 to vector<16x128xf32>
    %24 = arith.maximumf %22, %23 : vector<16x128xf32>
    %25 = arith.truncf %24 : vector<16x128xf32> to vector<16x128xbf16>
    %c0_16 = arith.constant 0 : index
    %c0_17 = arith.constant 0 : index
    %26 = vector.load %arg5[%c0_16, %c0_17] : memref<128x128xbf16, #tpu.memory_space<vmem>>, vector<128x128xbf16>
    %cst_18 = arith.constant dense<0.000000e+00> : vector<16x128xf32>
    %27 = tpu.matmul %25, %26, %cst_18 {dimension_numbers = #tpu.dot_dimension_numbers<[1], [0], [0], [1], [0, 0, 1, 1], [], []>} : vector<16x128xbf16>, vector<128x128xbf16>, vector<16x128xf32> -> vector<16x128xf32>
    %c0_19 = arith.constant 0 : index
    %c896 = arith.constant 896 : index
    %28 = vector.load %arg7[%c0_19, %c896] : memref<1x1152xf32, #tpu.memory_space<vmem>>, vector<1x128xf32>
    %29 = vector.broadcast %28 : vector<1x128xf32> to vector<16x128xf32>
    %30 = arith.addf %27, %29 : vector<16x128xf32>
    %cst_20 = arith.constant 0.000000e+00 : f32
    %31 = vector.broadcast %cst_20 : f32 to vector<16x128xf32>
    %32 = arith.maximumf %30, %31 : vector<16x128xf32>
    %33 = arith.truncf %32 : vector<16x128xf32> to vector<16x128xbf16>
    %c0_21 = arith.constant 0 : index
    %c0_22 = arith.constant 0 : index
    %34 = vector.load %arg6[%c0_21, %c0_22] : memref<128x128xbf16, #tpu.memory_space<vmem>>, vector<128x128xbf16>
    %cst_23 = arith.constant dense<0.000000e+00> : vector<16x128xf32>
    %35 = tpu.matmul %33, %34, %cst_23 {dimension_numbers = #tpu.dot_dimension_numbers<[1], [0], [0], [1], [0, 0, 1, 1], [], []>} : vector<16x128xbf16>, vector<128x128xbf16>, vector<16x128xf32> -> vector<16x128xf32>
    %c0_24 = arith.constant 0 : index
    %c1024 = arith.constant 1024 : index
    %36 = vector.load %arg7[%c0_24, %c1024] : memref<1x1152xf32, #tpu.memory_space<vmem>>, vector<1x128xf32>
    %37 = vector.broadcast %36 : vector<1x128xf32> to vector<16x128xf32>
    %38 = arith.addf %35, %37 : vector<16x128xf32>
    %c0_25 = arith.constant 0 : index
    %c0_26 = arith.constant 0 : index
    %39 = vector.load %arg8[%c0_25, %c0_26] : memref<16x128xf32, #tpu.memory_space<vmem>>, vector<16x128xf32>
    tpu.vector_store %arg8[%c0_25, %c0_26], %38 {strides = array<i32>} : memref<16x128xf32, #tpu.memory_space<vmem>>, vector<16x128xf32>,
    return
  }
  func.func @transform_0(%arg0: i32) -> (i32, i32) {
    %c0_i32 = arith.constant 0 : i32
    %c0_i32_0 = arith.constant 0 : i32
    return %arg0, %c0_i32 : i32, i32
  }
  func.func @transform_1(%arg0: i32) -> (i32, i32) {
    %c0_i32 = arith.constant 0 : i32
    %c0_i32_0 = arith.constant 0 : i32
    %c0_i32_1 = arith.constant 0 : i32
    return %c0_i32, %c0_i32_0 : i32, i32
  }
  func.func @transform_2(%arg0: i32) -> (i32, i32) {
    %c0_i32 = arith.constant 0 : i32
    %c0_i32_0 = arith.constant 0 : i32
    %c0_i32_1 = arith.constant 0 : i32
    return %c0_i32, %c0_i32_0 : i32, i32
  }
  func.func @transform_3(%arg0: i32) -> (i32, i32) {
    %c0_i32 = arith.constant 0 : i32
    %c0_i32_0 = arith.constant 0 : i32
    %c0_i32_1 = arith.constant 0 : i32
    return %c0_i32, %c0_i32_0 : i32, i32
  }
  func.func @transform_4(%arg0: i32) -> (i32, i32) {
    %c0_i32 = arith.constant 0 : i32
    %c0_i32_0 = arith.constant 0 : i32
    %c0_i32_1 = arith.constant 0 : i32
    return %c0_i32, %c0_i32_0 : i32, i32
  }
  func.func @transform_5(%arg0: i32) -> (i32, i32) {
    %c0_i32 = arith.constant 0 : i32
    %c0_i32_0 = arith.constant 0 : i32
    %c0_i32_1 = arith.constant 0 : i32
    return %c0_i32, %c0_i32_0 : i32, i32
  }
  func.func @transform_6(%arg0: i32) -> (i32, i32) {
    %c0_i32 = arith.constant 0 : i32
    %c0_i32_0 = arith.constant 0 : i32
    %c0_i32_1 = arith.constant 0 : i32
    return %c0_i32, %c0_i32_0 : i32, i32
  }
  func.func @transform_7(%arg0: i32) -> (i32, i32) {
    %c0_i32 = arith.constant 0 : i32
    %c0_i32_0 = arith.constant 0 : i32
    return %arg0, %c0_i32 : i32, i32
  }
}

</mosaic_0001>

<llo_original>
// kernel: sn_mlp_forward.1
$region0: #{sn_mlp_forward.1}
  #allocation0 [shape = 'u32[]', space=smem, size = 0x4, offset = 0x4, fixed_abs, tag = 'smem constant byte address 0x4 - core index']
  #allocation1 [shape = 'u32[72,128]{1,0:T(1,128)}', space=vmem, size = 0x9000, scoped, tag = 'internal scratch']
  %s0 = inlined_call_operand.vmem [shape: f32[16,768], index: 0, kind: input, shape index: {}]
  %s1 = inlined_call_operand.vmem [shape: bf16[768,512], index: 1, kind: input, shape index: {}]
  %s2 = inlined_call_operand.vmem [shape: bf16[512,256], index: 2, kind: input, shape index: {}]
  %s3 = inlined_call_operand.vmem [shape: bf16[256,128], index: 3, kind: input, shape index: {}]
  %s4 = inlined_call_operand.vmem [shape: bf16[128,128], index: 4, kind: input, shape index: {}]
  %s5 = inlined_call_operand.hbm [shape: bf16[128,128], index: 5, kind: input, shape index: {}]
  %s6 = inlined_call_operand.hbm [shape: f32[1,1152], index: 6, kind: input, shape index: {}]
  %s7 = inlined_call_operand.vmem [shape: f32[16,128], index: 7, kind: output, shape index: {}]
  %s8 = sld [smem:[#allocation0]]
  $region46: #{sn_mlp_forward.1} parent=0
    _
  %s10 = ssub.s32 1, %s8
  %s11 = scalar_select 0, %s10, %s8
  $region1: #{sn_mlp_forward.1} parent=0
    #allocation2 [shape = 'u8[32768]{0}', space=vmem, size = 0x8000, scoped, tag = 'input window, operand 5, single buffered']
    #allocation3 [shape = 's32[1]{0}', space=sflag, size = 0x4, scoped, tag = 'scoped memory for sn_mlp_forward.1']
    #allocation4 [shape = 'u8[4608]{0}', space=vmem, size = 0x1400, scoped, tag = 'input window, operand 6, single buffered']
    #allocation5 [shape = 's32[1]{0}', space=sflag, size = 0x4, scoped, tag = 'scoped memory for sn_mlp_forward.1']
    %12 = vsyncpa [#allocation3], 0
    %13 = vsyncpa [#allocation5], 0
    // Predicated region
    $region2: #{sn_mlp_forward.1} parent=1 // pred_check
      _
    $region3: #{sn_mlp_forward.1} parent=1 // pred_check_branch
      %15 = sbr.rel (0) target = $region5
    $region4: #{sn_mlp_forward.1} parent=1 // pred_region
      _
    $region5: #{sn_mlp_forward.1} parent=1 // pred_fallthru
      _
    // Predicated region
    $region6: #{sn_mlp_forward.1} parent=1 // pred_check
      _
    $region7: #{sn_mlp_forward.1} parent=1 // pred_check_branch
      %17 = sbr.rel (0) target = $region9
    $region8: #{sn_mlp_forward.1} parent=1 // pred_region
      _
    $region9: #{sn_mlp_forward.1} parent=1 // pred_fallthru
      _
    // Predicated region
    $region10: #{sn_mlp_forward.1} parent=1 // pred_check
      _
    $region11: #{sn_mlp_forward.1} parent=1 // pred_check_branch
      %19 = sbr.rel (0) target = $region13
    $region12: #{sn_mlp_forward.1} parent=1 // pred_region
      _
    $region13: #{sn_mlp_forward.1} parent=1 // pred_fallthru
      _
    // Predicated region
    $region14: #{sn_mlp_forward.1} parent=1 // pred_check
      _
    $region15: #{sn_mlp_forward.1} parent=1 // pred_check_branch
      %21 = sbr.rel (0) target = $region17
    $region16: #{sn_mlp_forward.1} parent=1 // pred_region
      _
    $region17: #{sn_mlp_forward.1} parent=1 // pred_fallthru
      _
    // Predicated region
    $region18: #{sn_mlp_forward.1} parent=1 // pred_check
      _
    $region19: #{sn_mlp_forward.1} parent=1 // pred_check_branch
      %23 = sbr.rel (0) target = $region21
    $region20: #{sn_mlp_forward.1} parent=1 // pred_region
      _
    $region21: #{sn_mlp_forward.1} parent=1 // pred_fallthru
      _
    // Predicated region
    $region22: #{sn_mlp_forward.1} parent=1 // pred_check
      _
    $region23: #{sn_mlp_forward.1} parent=1 // pred_check_branch
      %25 = sbr.rel (0) target = $region25
    $region24: #{sn_mlp_forward.1} parent=1 // pred_region
      %27 = vsyncadd [#allocation3], 0
      %s28 = sshll.u32 %s5, 4
      %s29 = int_to_ptr.hbm [resolvable:$true] %s28
      %s30 = sshll.u32 [#allocation2], 4
      %s31 = int_to_ptr.vmem [resolvable:$true] %s30
      %36 = dma.hbm_to_vmem [thread:$0]  %s29, 1024, %s31, [#allocation3], 64, 64, 4
    $region25: #{sn_mlp_forward.1} parent=1 // pred_fallthru
      _
    // Predicated region
    $region26: #{sn_mlp_forward.1} parent=1 // pred_check
      _
    $region27: #{sn_mlp_forward.1} parent=1 // pred_check_branch
      %38 = sbr.rel (0) target = $region29
    $region28: #{sn_mlp_forward.1} parent=1 // pred_region
      %40 = vsyncadd [#allocation5], 0
      %s42 = sshll.u32 %s6, 4
      %s43 = int_to_ptr.hbm [resolvable:$true] %s42
      %s44 = sshll.u32 [#allocation4], 4
      %s45 = int_to_ptr.vmem [resolvable:$true] %s44
      %47 = dma.hbm_to_vmem [thread:$0]  %s43, 144, %s45, [#allocation5]
    $region29: #{sn_mlp_forward.1} parent=1 // pred_fallthru
      _
    // Predicated region
    $region30: #{sn_mlp_forward.1} parent=1 // pred_check
      _
    $region31: #{sn_mlp_forward.1} parent=1 // pred_check_branch
      %49 = sbr.rel (0) target = $region33
    $region32: #{sn_mlp_forward.1} parent=1 // pred_region
      %51 = dma.done [#allocation3], 1024
    $region33: #{sn_mlp_forward.1} parent=1 // pred_fallthru
      _
    // Predicated region
    $region34: #{sn_mlp_forward.1} parent=1 // pred_check
      _
    $region35: #{sn_mlp_forward.1} parent=1 // pred_check_branch
      %53 = sbr.rel (0) target = $region37
    $region36: #{sn_mlp_forward.1} parent=1 // pred_region
      %55 = dma.done [#allocation5], 144
    $region37: #{sn_mlp_forward.1} parent=1 // pred_fallthru
      _
    %v56 = vld [vmem:[%s0] sm:$0xff]
    %v57 = vld [vmem:[%s0 + $0x8] sm:$0xff]
    %v58 = vld [vmem:[%s0 + $0x10] sm:$0xff]
    %v59 = vld [vmem:[%s0 + $0x18] sm:$0xff]
    %v60 = vld [vmem:[%s0 + $0x20] sm:$0xff]
    %v61 = vld [vmem:[%s0 + $0x28] sm:$0xff]
    %v62 = vld [vmem:[%s0 + $0x30] sm:$0xff]
    %v63 = vld [vmem:[%s0 + $0x38] sm:$0xff]
    %v64 = vld [vmem:[%s0 + $0x40] sm:$0xff]
    %v65 = vld [vmem:[%s0 + $0x48] sm:$0xff]
    %v66 = vld [vmem:[%s0 + $0x50] sm:$0xff]
    %v67 = vld [vmem:[%s0 + $0x58] sm:$0xff]
    %v68 = vpack.c.bf16 %v62, %v56
    %v69 = vpack.c.bf16 %v63, %v57
    %v70 = vpack.c.bf16 %v64, %v58
    %v71 = vpack.c.bf16 %v65, %v59
    %v72 = vpack.c.bf16 %v66, %v60
    %v73 = vpack.c.bf16 %v67, %v61
    %v74 = vld [vmem:[%s1] sm:$0xff]
    %v75 = vld [vmem:[%s1 + $0x8] sm:$0xff]
    %v76 = vld [vmem:[%s1 + $0x10] sm:$0xff]
    %v77 = vld [vmem:[%s1 + $0x18] sm:$0xff]
    %v78 = vld [vmem:[%s1 + $0x20] sm:$0xff]
    %v79 = vld [vmem:[%s1 + $0x28] sm:$0xff]
    %v80 = vld [vmem:[%s1 + $0x30] sm:$0xff]
    %v81 = vld [vmem:[%s1 + $0x38] sm:$0xff]
    %v82 = vld [vmem:[%s1 + $0x40] sm:$0xff]
    %v83 = vld [vmem:[%s1 + $0x48] sm:$0xff]
    %v84 = vld [vmem:[%s1 + $0x50] sm:$0xff]
    %v85 = vld [vmem:[%s1 + $0x58] sm:$0xff]
    %v86 = vld [vmem:[%s1 + $0x60] sm:$0xff]
    %v87 = vld [vmem:[%s1 + $0x68] sm:$0xff]
    %v88 = vld [vmem:[%s1 + $0x70] sm:$0xff]
    %v89 = vld [vmem:[%s1 + $0x78] sm:$0xff]
    %v90 = vld [vmem:[%s1 + $0x80] sm:$0xff]
    %v91 = vld [vmem:[%s1 + $0x88] sm:$0xff]
    %v92 = vld [vmem:[%s1 + $0x90] sm:$0xff]
    %v93 = vld [vmem:[%s1 + $0x98] sm:$0xff]
    %v94 = vld [vmem:[%s1 + $0xa0] sm:$0xff]
    %v95 = vld [vmem:[%s1 + $0xa8] sm:$0xff]
    %v96 = vld [vmem:[%s1 + $0xb0] sm:$0xff]
    %v97 = vld [vmem:[%s1 + $0xb8] sm:$0xff]
    %v98 = vld [vmem:[%s1 + $0xc0] sm:$0xff]
    %v99 = vld [vmem:[%s1 + $0xc8] sm:$0xff]
    %v100 = vld [vmem:[%s1 + $0xd0] sm:$0xff]
    %v101 = vld [vmem:[%s1 + $0xd8] sm:$0xff]
    %v102 = vld [vmem:[%s1 + $0xe0] sm:$0xff]
    %v103 = vld [vmem:[%s1 + $0xe8] sm:$0xff]
    %v104 = vld [vmem:[%s1 + $0xf0] sm:$0xff]
    %v105 = vld [vmem:[%s1 + $0xf8] sm:$0xff]
    %v106 = vld [vmem:[%s1 + $0x100] sm:$0xff]
    %v107 = vld [vmem:[%s1 + $0x108] sm:$0xff]
    %v108 = vld [vmem:[%s1 + $0x110] sm:$0xff]
    %v109 = vld [vmem:[%s1 + $0x118] sm:$0xff]
    %v110 = vld [vmem:[%s1 + $0x120] sm:$0xff]
    %v111 = vld [vmem:[%s1 + $0x128] sm:$0xff]
    %v112 = vld [vmem:[%s1 + $0x130] sm:$0xff]
    %v113 = vld [vmem:[%s1 + $0x138] sm:$0xff]
    %v114 = vld [vmem:[%s1 + $0x140] sm:$0xff]
    %v115 = vld [vmem:[%s1 + $0x148] sm:$0xff]
    %v116 = vld [vmem:[%s1 + $0x150] sm:$0xff]
    %v117 = vld [vmem:[%s1 + $0x158] sm:$0xff]
    %v118 = vld [vmem:[%s1 + $0x160] sm:$0xff]
    %v119 = vld [vmem:[%s1 + $0x168] sm:$0xff]
    %v120 = vld [vmem:[%s1 + $0x170] sm:$0xff]
    %v121 = vld [vmem:[%s1 + $0x178] sm:$0xff]
    %v122 = vld [vmem:[%s1 + $0x180] sm:$0xff]
    %v123 = vld [vmem:[%s1 + $0x188] sm:$0xff]
    %v124 = vld [vmem:[%s1 + $0x190] sm:$0xff]
    %v125 = vld [vmem:[%s1 + $0x198] sm:$0xff]
    %v126 = vld [vmem:[%s1 + $0x1a0] sm:$0xff]
    %v127 = vld [vmem:[%s1 + $0x1a8] sm:$0xff]
    %v128 = vld [vmem:[%s1 + $0x1b0] sm:$0xff]
    %v129 = vld [vmem:[%s1 + $0x1b8] sm:$0xff]
    %v130 = vld [vmem:[%s1 + $0x1c0] sm:$0xff]
    %v131 = vld [vmem:[%s1 + $0x1c8] sm:$0xff]
    %v132 = vld [vmem:[%s1 + $0x1d0] sm:$0xff]
    %v133 = vld [vmem:[%s1 + $0x1d8] sm:$0xff]
    %v134 = vld [vmem:[%s1 + $0x1e0] sm:$0xff]
    %v135 = vld [vmem:[%s1 + $0x1e8] sm:$0xff]
    %v136 = vld [vmem:[%s1 + $0x1f0] sm:$0xff]
    %v137 = vld [vmem:[%s1 + $0x1f8] sm:$0xff]
    %v138 = vld [vmem:[%s1 + $0x200] sm:$0xff]
    %v139 = vld [vmem:[%s1 + $0x208] sm:$0xff]
    %v140 = vld [vmem:[%s1 + $0x210] sm:$0xff]
    %v141 = vld [vmem:[%s1 + $0x218] sm:$0xff]
    %v142 = vld [vmem:[%s1 + $0x220] sm:$0xff]
    %v143 = vld [vmem:[%s1 + $0x228] sm:$0xff]
    %v144 = vld [vmem:[%s1 + $0x230] sm:$0xff]
    %v145 = vld [vmem:[%s1 + $0x238] sm:$0xff]
    %v146 = vld [vmem:[%s1 + $0x240] sm:$0xff]
    %v147 = vld [vmem:[%s1 + $0x248] sm:$0xff]
    %v148 = vld [vmem:[%s1 + $0x250] sm:$0xff]
    %v149 = vld [vmem:[%s1 + $0x258] sm:$0xff]
    %v150 = vld [vmem:[%s1 + $0x260] sm:$0xff]
    %v151 = vld [vmem:[%s1 + $0x268] sm:$0xff]
    %v152 = vld [vmem:[%s1 + $0x270] sm:$0xff]
    %v153 = vld [vmem:[%s1 + $0x278] sm:$0xff]
    %v154 = vld [vmem:[%s1 + $0x280] sm:$0xff]
    %v155 = vld [vmem:[%s1 + $0x288] sm:$0xff]
    %v156 = vld [vmem:[%s1 + $0x290] sm:$0xff]
    %v157 = vld [vmem:[%s1 + $0x298] sm:$0xff]
    %v158 = vld [vmem:[%s1 + $0x2a0] sm:$0xff]
    %v159 = vld [vmem:[%s1 + $0x2a8] sm:$0xff]
    %v160 = vld [vmem:[%s1 + $0x2b0] sm:$0xff]
    %v161 = vld [vmem:[%s1 + $0x2b8] sm:$0xff]
    %v162 = vld [vmem:[%s1 + $0x2c0] sm:$0xff]
    %v163 = vld [vmem:[%s1 + $0x2c8] sm:$0xff]
    %v164 = vld [vmem:[%s1 + $0x2d0] sm:$0xff]
    %v165 = vld [vmem:[%s1 + $0x2d8] sm:$0xff]
    %v166 = vld [vmem:[%s1 + $0x2e0] sm:$0xff]
    %v167 = vld [vmem:[%s1 + $0x2e8] sm:$0xff]
    %v168 = vld [vmem:[%s1 + $0x2f0] sm:$0xff]
    %v169 = vld [vmem:[%s1 + $0x2f8] sm:$0xff]
    %v170 = vld [vmem:[%s1 + $0x300] sm:$0xff]
    %v171 = vld [vmem:[%s1 + $0x308] sm:$0xff]
    %v172 = vld [vmem:[%s1 + $0x310] sm:$0xff]
    %v173 = vld [vmem:[%s1 + $0x318] sm:$0xff]
    %v174 = vld [vmem:[%s1 + $0x320] sm:$0xff]
    %v175 = vld [vmem:[%s1 + $0x328] sm:$0xff]
    %v176 = vld [vmem:[%s1 + $0x330] sm:$0xff]
    %v177 = vld [vmem:[%s1 + $0x338] sm:$0xff]
    %v178 = vld [vmem:[%s1 + $0x340] sm:$0xff]
    %v179 = vld [vmem:[%s1 + $0x348] sm:$0xff]
    %v180 = vld [vmem:[%s1 + $0x350] sm:$0xff]
    %v181 = vld [vmem:[%s1 + $0x358] sm:$0xff]
    %v182 = vld [vmem:[%s1 + $0x360] sm:$0xff]
    %v183 = vld [vmem:[%s1 + $0x368] sm:$0xff]
    %v184 = vld [vmem:[%s1 + $0x370] sm:$0xff]
    %v185 = vld [vmem:[%s1 + $0x378] sm:$0xff]
    %v186 = vld [vmem:[%s1 + $0x380] sm:$0xff]
    %v187 = vld [vmem:[%s1 + $0x388] sm:$0xff]
    %v188 = vld [vmem:[%s1 + $0x390] sm:$0xff]
    %v189 = vld [vmem:[%s1 + $0x398] sm:$0xff]
    %v190 = vld [vmem:[%s1 + $0x3a0] sm:$0xff]
    %v191 = vld [vmem:[%s1 + $0x3a8] sm:$0xff]
    %v192 = vld [vmem:[%s1 + $0x3b0] sm:$0xff]
    %v193 = vld [vmem:[%s1 + $0x3b8] sm:$0xff]
    %v194 = vld [vmem:[%s1 + $0x3c0] sm:$0xff]
    %v195 = vld [vmem:[%s1 + $0x3c8] sm:$0xff]
    %v196 = vld [vmem:[%s1 + $0x3d0] sm:$0xff]
    %v197 = vld [vmem:[%s1 + $0x3d8] sm:$0xff]
    %v198 = vld [vmem:[%s1 + $0x3e0] sm:$0xff]
    %v199 = vld [vmem:[%s1 + $0x3e8] sm:$0xff]
    %v200 = vld [vmem:[%s1 + $0x3f0] sm:$0xff]
    %v201 = vld [vmem:[%s1 + $0x3f8] sm:$0xff]
    %v202 = vld [vmem:[%s1 + $0x400] sm:$0xff]
    %v203 = vld [vmem:[%s1 + $0x408] sm:$0xff]
    %v204 = vld [vmem:[%s1 + $0x410] sm:$0xff]
    %v205 = vld [vmem:[%s1 + $0x418] sm:$0xff]
    %v206 = vld [vmem:[%s1 + $0x420] sm:$0xff]
    %v207 = vld [vmem:[%s1 + $0x428] sm:$0xff]
    %v208 = vld [vmem:[%s1 + $0x430] sm:$0xff]
    %v209 = vld [vmem:[%s1 + $0x438] sm:$0xff]
    %v210 = vld [vmem:[%s1 + $0x440] sm:$0xff]
    %v211 = vld [vmem:[%s1 + $0x448] sm:$0xff]
    %v212 = vld [vmem:[%s1 + $0x450] sm:$0xff]
    %v213 = vld [vmem:[%s1 + $0x458] sm:$0xff]
    %v214 = vld [vmem:[%s1 + $0x460] sm:$0xff]
    %v215 = vld [vmem:[%s1 + $0x468] sm:$0xff]
    %v216 = vld [vmem:[%s1 + $0x470] sm:$0xff]
    %v217 = vld [vmem:[%s1 + $0x478] sm:$0xff]
    %v218 = vld [vmem:[%s1 + $0x480] sm:$0xff]
    %v219 = vld [vmem:[%s1 + $0x488] sm:$0xff]
    %v220 = vld [vmem:[%s1 + $0x490] sm:$0xff]
    %v221 = vld [vmem:[%s1 + $0x498] sm:$0xff]
    %v222 = vld [vmem:[%s1 + $0x4a0] sm:$0xff]
    %v223 = vld [vmem:[%s1 + $0x4a8] sm:$0xff]
    %v224 = vld [vmem:[%s1 + $0x4b0] sm:$0xff]
    %v225 = vld [vmem:[%s1 + $0x4b8] sm:$0xff]
    %v226 = vld [vmem:[%s1 + $0x4c0] sm:$0xff]
    %v227 = vld [vmem:[%s1 + $0x4c8] sm:$0xff]
    %v228 = vld [vmem:[%s1 + $0x4d0] sm:$0xff]
    %v229 = vld [vmem:[%s1 + $0x4d8] sm:$0xff]
    %v230 = vld [vmem:[%s1 + $0x4e0] sm:$0xff]
    %v231 = vld [vmem:[%s1 + $0x4e8] sm:$0xff]
    %v232 = vld [vmem:[%s1 + $0x4f0] sm:$0xff]
    %v233 = vld [vmem:[%s1 + $0x4f8] sm:$0xff]
    %v234 = vld [vmem:[%s1 + $0x500] sm:$0xff]
    %v235 = vld [vmem:[%s1 + $0x508] sm:$0xff]
    %v236 = vld [vmem:[%s1 + $0x510] sm:$0xff]
    %v237 = vld [vmem:[%s1 + $0x518] sm:$0xff]
    %v238 = vld [vmem:[%s1 + $0x520] sm:$0xff]
    %v239 = vld [vmem:[%s1 + $0x528] sm:$0xff]
    %v240 = vld [vmem:[%s1 + $0x530] sm:$0xff]
    %v241 = vld [vmem:[%s1 + $0x538] sm:$0xff]
    %v242 = vld [vmem:[%s1 + $0x540] sm:$0xff]
    %v243 = vld [vmem:[%s1 + $0x548] sm:$0xff]
    %v244 = vld [vmem:[%s1 + $0x550] sm:$0xff]
    %v245 = vld [vmem:[%s1 + $0x558] sm:$0xff]
    %v246 = vld [vmem:[%s1 + $0x560] sm:$0xff]
    %v247 = vld [vmem:[%s1 + $0x568] sm:$0xff]
    %v248 = vld [vmem:[%s1 + $0x570] sm:$0xff]
    %v249 = vld [vmem:[%s1 + $0x578] sm:$0xff]
    %v250 = vld [vmem:[%s1 + $0x580] sm:$0xff]
    %v251 = vld [vmem:[%s1 + $0x588] sm:$0xff]
    %v252 = vld [vmem:[%s1 + $0x590] sm:$0xff]
    %v253 = vld [vmem:[%s1 + $0x598] sm:$0xff]
    %v254 = vld [vmem:[%s1 + $0x5a0] sm:$0xff]
    %v255 = vld [vmem:[%s1 + $0x5a8] sm:$0xff]
    %v256 = vld [vmem:[%s1 + $0x5b0] sm:$0xff]
    %v257 = vld [vmem:[%s1 + $0x5b8] sm:$0xff]
    %v258 = vld [vmem:[%s1 + $0x5c0] sm:$0xff]
    %v259 = vld [vmem:[%s1 + $0x5c8] sm:$0xff]
    %v260 = vld [vmem:[%s1 + $0x5d0] sm:$0xff]
    %v261 = vld [vmem:[%s1 + $0x5d8] sm:$0xff]
    %v262 = vld [vmem:[%s1 + $0x5e0] sm:$0xff]
    %v263 = vld [vmem:[%s1 + $0x5e8] sm:$0xff]
    %v264 = vld [vmem:[%s1 + $0x5f0] sm:$0xff]
    %v265 = vld [vmem:[%s1 + $0x5f8] sm:$0xff]
    %v266 = vld [vmem:[#allocation4] sm:$0xf]
    %v268 = vperm.slane %v266, 0
    %v269 = vperm.slane %v266, 1
    %v270 = vperm.slane %v266, 2
    %v271 = vperm.slane %v266, 3
    %v468 = vunpack.c.l.b16 %v74
    %v469 = vunpack.c.h.b16 %v74
    %v470 = vunpack.c.l.b16 %v75
    %v471 = vunpack.c.h.b16 %v75
    %v472 = vunpack.c.l.b16 %v76
    %v473 = vunpack.c.h.b16 %v76
    %v474 = vunpack.c.l.b16 %v77
    %v475 = vunpack.c.h.b16 %v77
    %v476 = vunpack.c.l.b16 %v78
    %v477 = vunpack.c.h.b16 %v78
    %v478 = vunpack.c.l.b16 %v79
    %v479 = vunpack.c.h.b16 %v79
    %v480 = vunpack.c.l.b16 %v80
    %v481 = vunpack.c.h.b16 %v80
    %v482 = vunpack.c.l.b16 %v81
    %v483 = vunpack.c.h.b16 %v81
    %v484 = vunpack.c.l.b16 %v82
    %v485 = vunpack.c.h.b16 %v82
    %v486 = vunpack.c.l.b16 %v83
    %v487 = vunpack.c.h.b16 %v83
    %v488 = vunpack.c.l.b16 %v84
    %v489 = vunpack.c.h.b16 %v84
    %v490 = vunpack.c.l.b16 %v85
    %v491 = vunpack.c.h.b16 %v85
    %v492 = vunpack.c.l.b16 %v86
    %v493 = vunpack.c.h.b16 %v86
    %v494 = vunpack.c.l.b16 %v87
    %v495 = vunpack.c.h.b16 %v87
    %v496 = vunpack.c.l.b16 %v88
    %v497 = vunpack.c.h.b16 %v88
    %v498 = vunpack.c.l.b16 %v89
    %v499 = vunpack.c.h.b16 %v89
    %v500 = vunpack.c.l.b16 %v90
    %v501 = vunpack.c.h.b16 %v90
    %v502 = vunpack.c.l.b16 %v91
    %v503 = vunpack.c.h.b16 %v91
    %v504 = vunpack.c.l.b16 %v92
    %v505 = vunpack.c.h.b16 %v92
    %v506 = vunpack.c.l.b16 %v93
    %v507 = vunpack.c.h.b16 %v93
    %v508 = vunpack.c.l.b16 %v94
    %v509 = vunpack.c.h.b16 %v94
    %v510 = vunpack.c.l.b16 %v95
    %v511 = vunpack.c.h.b16 %v95
    %v512 = vunpack.c.l.b16 %v96
    %v513 = vunpack.c.h.b16 %v96
    %v514 = vunpack.c.l.b16 %v97
    %v515 = vunpack.c.h.b16 %v97
    %v516 = vunpack.c.l.b16 %v98
    %v517 = vunpack.c.h.b16 %v98
    %v518 = vunpack.c.l.b16 %v99
    %v519 = vunpack.c.h.b16 %v99
    %v520 = vunpack.c.l.b16 %v100
    %v521 = vunpack.c.h.b16 %v100
    %v522 = vunpack.c.l.b16 %v101
    %v523 = vunpack.c.h.b16 %v101
    %v524 = vunpack.c.l.b16 %v102
    %v525 = vunpack.c.h.b16 %v102
    %v526 = vunpack.c.l.b16 %v103
    %v527 = vunpack.c.h.b16 %v103
    %v528 = vunpack.c.l.b16 %v104
    %v529 = vunpack.c.h.b16 %v104
    %v530 = vunpack.c.l.b16 %v105
    %v531 = vunpack.c.h.b16 %v105
    %v532 = vunpack.c.l.b16 %v106
    %v533 = vunpack.c.h.b16 %v106
    %v534 = vunpack.c.l.b16 %v107
    %v535 = vunpack.c.h.b16 %v107
    %v536 = vunpack.c.l.b16 %v108
    %v537 = vunpack.c.h.b16 %v108
    %v538 = vunpack.c.l.b16 %v109
    %v539 = vunpack.c.h.b16 %v109
    %v540 = vunpack.c.l.b16 %v110
    %v541 = vunpack.c.h.b16 %v110
    %v542 = vunpack.c.l.b16 %v111
    %v543 = vunpack.c.h.b16 %v111
    %v544 = vunpack.c.l.b16 %v112
    %v545 = vunpack.c.h.b16 %v112
    %v546 = vunpack.c.l.b16 %v113
    %v547 = vunpack.c.h.b16 %v113
    %v548 = vunpack.c.l.b16 %v114
    %v549 = vunpack.c.h.b16 %v114
    %v550 = vunpack.c.l.b16 %v115
    %v551 = vunpack.c.h.b16 %v115
    %v552 = vunpack.c.l.b16 %v116
    %v553 = vunpack.c.h.b16 %v116
    %v554 = vunpack.c.l.b16 %v117
    %v555 = vunpack.c.h.b16 %v117
    %v556 = vunpack.c.l.b16 %v118
    %v557 = vunpack.c.h.b16 %v118
    %v558 = vunpack.c.l.b16 %v119
    %v559 = vunpack.c.h.b16 %v119
    %v560 = vunpack.c.l.b16 %v120
    %v561 = vunpack.c.h.b16 %v120
    %v562 = vunpack.c.l.b16 %v121
    %v563 = vunpack.c.h.b16 %v121
    %v564 = vunpack.c.l.b16 %v122
    %v565 = vunpack.c.h.b16 %v122
    %v566 = vunpack.c.l.b16 %v123
    %v567 = vunpack.c.h.b16 %v123
    %v568 = vunpack.c.l.b16 %v124
    %v569 = vunpack.c.h.b16 %v124
    %v570 = vunpack.c.l.b16 %v125
    %v571 = vunpack.c.h.b16 %v125
    %v572 = vunpack.c.l.b16 %v126
    %v573 = vunpack.c.h.b16 %v126
    %v574 = vunpack.c.l.b16 %v127
    %v575 = vunpack.c.h.b16 %v127
    %v576 = vunpack.c.l.b16 %v128
    %v577 = vunpack.c.h.b16 %v128
    %v578 = vunpack.c.l.b16 %v129
    %v579 = vunpack.c.h.b16 %v129
    %v580 = vunpack.c.l.b16 %v130
    %v581 = vunpack.c.h.b16 %v130
    %v582 = vunpack.c.l.b16 %v131
    %v583 = vunpack.c.h.b16 %v131
    %v584 = vunpack.c.l.b16 %v132
    %v585 = vunpack.c.h.b16 %v132
    %v586 = vunpack.c.l.b16 %v133
    %v587 = vunpack.c.h.b16 %v133
    %v588 = vunpack.c.l.b16 %v134
    %v589 = vunpack.c.h.b16 %v134
    %v590 = vunpack.c.l.b16 %v135
    %v591 = vunpack.c.h.b16 %v135
    %v592 = vunpack.c.l.b16 %v136
    %v593 = vunpack.c.h.b16 %v136
    %v594 = vunpack.c.l.b16 %v137
    %v595 = vunpack.c.h.b16 %v137
    %v596 = vunpack.c.l.b16 %v138
    %v597 = vunpack.c.h.b16 %v138
    %v598 = vunpack.c.l.b16 %v139
    %v599 = vunpack.c.h.b16 %v139
    %v600 = vunpack.c.l.b16 %v140
    %v601 = vunpack.c.h.b16 %v140
    %v602 = vunpack.c.l.b16 %v141
    %v603 = vunpack.c.h.b16 %v141
    %v604 = vunpack.c.l.b16 %v142
    %v605 = vunpack.c.h.b16 %v142
    %v606 = vunpack.c.l.b16 %v143
    %v607 = vunpack.c.h.b16 %v143
    %v608 = vunpack.c.l.b16 %v144
    %v609 = vunpack.c.h.b16 %v144
    %v610 = vunpack.c.l.b16 %v145
    %v611 = vunpack.c.h.b16 %v145
    %v612 = vunpack.c.l.b16 %v146
    %v613 = vunpack.c.h.b16 %v146
    %v614 = vunpack.c.l.b16 %v147
    %v615 = vunpack.c.h.b16 %v147
    %v616 = vunpack.c.l.b16 %v148
    %v617 = vunpack.c.h.b16 %v148
    %v618 = vunpack.c.l.b16 %v149
    %v619 = vunpack.c.h.b16 %v149
    %v620 = vunpack.c.l.b16 %v150
    %v621 = vunpack.c.h.b16 %v150
    %v622 = vunpack.c.l.b16 %v151
    %v623 = vunpack.c.h.b16 %v151
    %v624 = vunpack.c.l.b16 %v152
    %v625 = vunpack.c.h.b16 %v152
    %v626 = vunpack.c.l.b16 %v153
    %v627 = vunpack.c.h.b16 %v153
    %v628 = vunpack.c.l.b16 %v154
    %v629 = vunpack.c.h.b16 %v154
    %v630 = vunpack.c.l.b16 %v155
    %v631 = vunpack.c.h.b16 %v155
    %v632 = vunpack.c.l.b16 %v156
    %v633 = vunpack.c.h.b16 %v156
    %v634 = vunpack.c.l.b16 %v157
    %v635 = vunpack.c.h.b16 %v157
    %v636 = vunpack.c.l.b16 %v158
    %v637 = vunpack.c.h.b16 %v158
    %v638 = vunpack.c.l.b16 %v159
    %v639 = vunpack.c.h.b16 %v159
    %v640 = vunpack.c.l.b16 %v160
    %v641 = vunpack.c.h.b16 %v160
    %v642 = vunpack.c.l.b16 %v161
    %v643 = vunpack.c.h.b16 %v161
    %v644 = vunpack.c.l.b16 %v162
    %v645 = vunpack.c.h.b16 %v162
    %v646 = vunpack.c.l.b16 %v163
    %v647 = vunpack.c.h.b16 %v163
    %v648 = vunpack.c.l.b16 %v164
    %v649 = vunpack.c.h.b16 %v164
    %v650 = vunpack.c.l.b16 %v165
    %v651 = vunpack.c.h.b16 %v165
    %v652 = vunpack.c.l.b16 %v166
    %v653 = vunpack.c.h.b16 %v166
    %v654 = vunpack.c.l.b16 %v167
    %v655 = vunpack.c.h.b16 %v167
    %v656 = vunpack.c.l.b16 %v168
    %v657 = vunpack.c.h.b16 %v168
    %v658 = vunpack.c.l.b16 %v169
    %v659 = vunpack.c.h.b16 %v169
    %v660 = vunpack.c.l.b16 %v170
    %v661 = vunpack.c.h.b16 %v170
    %v662 = vunpack.c.l.b16 %v171
    %v663 = vunpack.c.h.b16 %v171
    %v664 = vunpack.c.l.b16 %v172
    %v665 = vunpack.c.h.b16 %v172
    %v666 = vunpack.c.l.b16 %v173
    %v667 = vunpack.c.h.b16 %v173
    %v668 = vunpack.c.l.b16 %v174
    %v669 = vunpack.c.h.b16 %v174
    %v670 = vunpack.c.l.b16 %v175
    %v671 = vunpack.c.h.b16 %v175
    %v672 = vunpack.c.l.b16 %v176
    %v673 = vunpack.c.h.b16 %v176
    %v674 = vunpack.c.l.b16 %v177
    %v675 = vunpack.c.h.b16 %v177
    %v676 = vunpack.c.l.b16 %v178
    %v677 = vunpack.c.h.b16 %v178
    %v678 = vunpack.c.l.b16 %v179
    %v679 = vunpack.c.h.b16 %v179
    %v680 = vunpack.c.l.b16 %v180
    %v681 = vunpack.c.h.b16 %v180
    %v682 = vunpack.c.l.b16 %v181
    %v683 = vunpack.c.h.b16 %v181
    %v684 = vunpack.c.l.b16 %v182
    %v685 = vunpack.c.h.b16 %v182
    %v686 = vunpack.c.l.b16 %v183
    %v687 = vunpack.c.h.b16 %v183
    %v688 = vunpack.c.l.b16 %v184
    %v689 = vunpack.c.h.b16 %v184
    %v690 = vunpack.c.l.b16 %v185
    %v691 = vunpack.c.h.b16 %v185
    %v692 = vunpack.c.l.b16 %v186
    %v693 = vunpack.c.h.b16 %v186
    %v694 = vunpack.c.l.b16 %v187
    %v695 = vunpack.c.h.b16 %v187
    %v696 = vunpack.c.l.b16 %v188
    %v697 = vunpack.c.h.b16 %v188
    %v698 = vunpack.c.l.b16 %v189
    %v699 = vunpack.c.h.b16 %v189
    %v700 = vunpack.c.l.b16 %v190
    %v701 = vunpack.c.h.b16 %v190
    %v702 = vunpack.c.l.b16 %v191
    %v703 = vunpack.c.h.b16 %v191
    %v704 = vunpack.c.l.b16 %v192
    %v705 = vunpack.c.h.b16 %v192
    %v706 = vunpack.c.l.b16 %v193
    %v707 = vunpack.c.h.b16 %v193
    %v708 = vunpack.c.l.b16 %v194
    %v709 = vunpack.c.h.b16 %v194
    %v710 = vunpack.c.l.b16 %v195
    %v711 = vunpack.c.h.b16 %v195
    %v712 = vunpack.c.l.b16 %v196
    %v713 = vunpack.c.h.b16 %v196
    %v714 = vunpack.c.l.b16 %v197
    %v715 = vunpack.c.h.b16 %v197
    %v716 = vunpack.c.l.b16 %v198
    %v717 = vunpack.c.h.b16 %v198
    %v718 = vunpack.c.l.b16 %v199
    %v719 = vunpack.c.h.b16 %v199
    %v720 = vunpack.c.l.b16 %v200
    %v721 = vunpack.c.h.b16 %v200
    %v722 = vunpack.c.l.b16 %v201
    %v723 = vunpack.c.h.b16 %v201
    %v724 = vunpack.c.l.b16 %v202
    %v725 = vunpack.c.h.b16 %v202
    %v726 = vunpack.c.l.b16 %v203
    %v727 = vunpack.c.h.b16 %v203
    %v728 = vunpack.c.l.b16 %v204
    %v729 = vunpack.c.h.b16 %v204
    %v730 = vunpack.c.l.b16 %v205
    %v731 = vunpack.c.h.b16 %v205
    %v732 = vunpack.c.l.b16 %v206
    %v733 = vunpack.c.h.b16 %v206
    %v734 = vunpack.c.l.b16 %v207
    %v735 = vunpack.c.h.b16 %v207
    %v736 = vunpack.c.l.b16 %v208
    %v737 = vunpack.c.h.b16 %v208
    %v738 = vunpack.c.l.b16 %v209
    %v739 = vunpack.c.h.b16 %v209
    %v740 = vunpack.c.l.b16 %v210
    %v741 = vunpack.c.h.b16 %v210
    %v742 = vunpack.c.l.b16 %v211
    %v743 = vunpack.c.h.b16 %v211
    %v744 = vunpack.c.l.b16 %v212
    %v745 = vunpack.c.h.b16 %v212
    %v746 = vunpack.c.l.b16 %v213
    %v747 = vunpack.c.h.b16 %v213
    %v748 = vunpack.c.l.b16 %v214
    %v749 = vunpack.c.h.b16 %v214
    %v750 = vunpack.c.l.b16 %v215
    %v751 = vunpack.c.h.b16 %v215
    %v752 = vunpack.c.l.b16 %v216
    %v753 = vunpack.c.h.b16 %v216
    %v754 = vunpack.c.l.b16 %v217
    %v755 = vunpack.c.h.b16 %v217
    %v756 = vunpack.c.l.b16 %v218
    %v757 = vunpack.c.h.b16 %v218
    %v758 = vunpack.c.l.b16 %v219
    %v759 = vunpack.c.h.b16 %v219
    %v760 = vunpack.c.l.b16 %v220
    %v761 = vunpack.c.h.b16 %v220
    %v762 = vunpack.c.l.b16 %v221
    %v763 = vunpack.c.h.b16 %v221
    %v764 = vunpack.c.l.b16 %v222
    %v765 = vunpack.c.h.b16 %v222
    %v766 = vunpack.c.l.b16 %v223
    %v767 = vunpack.c.h.b16 %v223
    %v768 = vunpack.c.l.b16 %v224
    %v769 = vunpack.c.h.b16 %v224
    %v770 = vunpack.c.l.b16 %v225
    %v771 = vunpack.c.h.b16 %v225
    %v772 = vunpack.c.l.b16 %v226
    %v773 = vunpack.c.h.b16 %v226
    %v774 = vunpack.c.l.b16 %v227
    %v775 = vunpack.c.h.b16 %v227
    %v776 = vunpack.c.l.b16 %v228
    %v777 = vunpack.c.h.b16 %v228
    %v778 = vunpack.c.l.b16 %v229
    %v779 = vunpack.c.h.b16 %v229
    %v780 = vunpack.c.l.b16 %v230
    %v781 = vunpack.c.h.b16 %v230
    %v782 = vunpack.c.l.b16 %v231
    %v783 = vunpack.c.h.b16 %v231
    %v784 = vunpack.c.l.b16 %v232
    %v785 = vunpack.c.h.b16 %v232
    %v786 = vunpack.c.l.b16 %v233
    %v787 = vunpack.c.h.b16 %v233
    %v788 = vunpack.c.l.b16 %v234
    %v789 = vunpack.c.h.b16 %v234
    %v790 = vunpack.c.l.b16 %v235
    %v791 = vunpack.c.h.b16 %v235
    %v792 = vunpack.c.l.b16 %v236
    %v793 = vunpack.c.h.b16 %v236
    %v794 = vunpack.c.l.b16 %v237
    %v795 = vunpack.c.h.b16 %v237
    %v796 = vunpack.c.l.b16 %v238
    %v797 = vunpack.c.h.b16 %v238
    %v798 = vunpack.c.l.b16 %v239
    %v799 = vunpack.c.h.b16 %v239
    %v800 = vunpack.c.l.b16 %v240
    %v801 = vunpack.c.h.b16 %v240
    %v802 = vunpack.c.l.b16 %v241
    %v803 = vunpack.c.h.b16 %v241
    %v804 = vunpack.c.l.b16 %v242
    %v805 = vunpack.c.h.b16 %v242
    %v806 = vunpack.c.l.b16 %v243
    %v807 = vunpack.c.h.b16 %v243
    %v808 = vunpack.c.l.b16 %v244
    %v809 = vunpack.c.h.b16 %v244
    %v810 = vunpack.c.l.b16 %v245
    %v811 = vunpack.c.h.b16 %v245
    %v812 = vunpack.c.l.b16 %v246
    %v813 = vunpack.c.h.b16 %v246
    %v814 = vunpack.c.l.b16 %v247
    %v815 = vunpack.c.h.b16 %v247
    %v816 = vunpack.c.l.b16 %v248
    %v817 = vunpack.c.h.b16 %v248
    %v818 = vunpack.c.l.b16 %v249
    %v819 = vunpack.c.h.b16 %v249
    %v820 = vunpack.c.l.b16 %v250
    %v821 = vunpack.c.h.b16 %v250
    %v822 = vunpack.c.l.b16 %v251
    %v823 = vunpack.c.h.b16 %v251
    %v824 = vunpack.c.l.b16 %v252
    %v825 = vunpack.c.h.b16 %v252
    %v826 = vunpack.c.l.b16 %v253
    %v827 = vunpack.c.h.b16 %v253
    %v828 = vunpack.c.l.b16 %v254
    %v829 = vunpack.c.h.b16 %v254
    %v830 = vunpack.c.l.b16 %v255
    %v831 = vunpack.c.h.b16 %v255
    %v832 = vunpack.c.l.b16 %v256
    %v833 = vunpack.c.h.b16 %v256
    %v834 = vunpack.c.l.b16 %v257
    %v835 = vunpack.c.h.b16 %v257
    %v836 = vunpack.c.l.b16 %v258
    %v837 = vunpack.c.h.b16 %v258
    %v838 = vunpack.c.l.b16 %v259
    %v839 = vunpack.c.h.b16 %v259
    %v840 = vunpack.c.l.b16 %v260
    %v841 = vunpack.c.h.b16 %v260
    %v842 = vunpack.c.l.b16 %v261
    %v843 = vunpack.c.h.b16 %v261
    %v844 = vunpack.c.l.b16 %v262
    %v845 = vunpack.c.h.b16 %v262
    %v846 = vunpack.c.l.b16 %v263
    %v847 = vunpack.c.h.b16 %v263
    %v848 = vunpack.c.l.b16 %v264
    %v849 = vunpack.c.h.b16 %v264
    %v850 = vunpack.c.l.b16 %v265
    %v851 = vunpack.c.h.b16 %v265
    %v852 = vpack.c.b16 %v472, %v468
    %v853 = vpack.c.b16 %v473, %v469
    %v854 = vpack.c.b16 %v474, %v470
    %v855 = vpack.c.b16 %v475, %v471
    %v856 = vpack.c.b16 %v480, %v476
    %v857 = vpack.c.b16 %v481, %v477
    %v858 = vpack.c.b16 %v482, %v478
    %v859 = vpack.c.b16 %v483, %v479
    %v860 = vpack.c.b16 %v488, %v484
    %v861 = vpack.c.b16 %v489, %v485
    %v862 = vpack.c.b16 %v490, %v486
    %v863 = vpack.c.b16 %v491, %v487
    %v864 = vpack.c.b16 %v496, %v492
    %v865 = vpack.c.b16 %v497, %v493
    %v866 = vpack.c.b16 %v498, %v494
    %v867 = vpack.c.b16 %v499, %v495
    %v868 = vpack.c.b16 %v504, %v500
    %v869 = vpack.c.b16 %v505, %v501
    %v870 = vpack.c.b16 %v506, %v502
    %v871 = vpack.c.b16 %v507, %v503
    %v872 = vpack.c.b16 %v512, %v508
    %v873 = vpack.c.b16 %v513, %v509
    %v874 = vpack.c.b16 %v514, %v510
    %v875 = vpack.c.b16 %v515, %v511
    %v876 = vpack.c.b16 %v520, %v516
    %v877 = vpack.c.b16 %v521, %v517
    %v878 = vpack.c.b16 %v522, %v518
    %v879 = vpack.c.b16 %v523, %v519
    %v880 = vpack.c.b16 %v528, %v524
    %v881 = vpack.c.b16 %v529, %v525
    %v882 = vpack.c.b16 %v530, %v526
    %v883 = vpack.c.b16 %v531, %v527
    %v884 = vpack.c.b16 %v536, %v532
    %v885 = vpack.c.b16 %v537, %v533
    %v886 = vpack.c.b16 %v538, %v534
    %v887 = vpack.c.b16 %v539, %v535
    %v888 = vpack.c.b16 %v544, %v540
    %v889 = vpack.c.b16 %v545, %v541
    %v890 = vpack.c.b16 %v546, %v542
    %v891 = vpack.c.b16 %v547, %v543
    %v892 = vpack.c.b16 %v552, %v548
    %v893 = vpack.c.b16 %v553, %v549
    %v894 = vpack.c.b16 %v554, %v550
    %v895 = vpack.c.b16 %v555, %v551
    %v896 = vpack.c.b16 %v560, %v556
    %v897 = vpack.c.b16 %v561, %v557
    %v898 = vpack.c.b16 %v562, %v558
    %v899 = vpack.c.b16 %v563, %v559
    %v900 = vpack.c.b16 %v568, %v564
    %v901 = vpack.c.b16 %v569, %v565
    %v902 = vpack.c.b16 %v570, %v566
    %v903 = vpack.c.b16 %v571, %v567
    %v904 = vpack.c.b16 %v576, %v572
    %v905 = vpack.c.b16 %v577, %v573
    %v906 = vpack.c.b16 %v578, %v574
    %v907 = vpack.c.b16 %v579, %v575
    %v908 = vpack.c.b16 %v584, %v580
    %v909 = vpack.c.b16 %v585, %v581
    %v910 = vpack.c.b16 %v586, %v582
    %v911 = vpack.c.b16 %v587, %v583
    %v912 = vpack.c.b16 %v592, %v588
    %v913 = vpack.c.b16 %v593, %v589
    %v914 = vpack.c.b16 %v594, %v590
    %v915 = vpack.c.b16 %v595, %v591
    %v916 = vpack.c.b16 %v600, %v596
    %v917 = vpack.c.b16 %v601, %v597
    %v918 = vpack.c.b16 %v602, %v598
    %v919 = vpack.c.b16 %v603, %v599
    %v920 = vpack.c.b16 %v608, %v604
    %v921 = vpack.c.b16 %v609, %v605
    %v922 = vpack.c.b16 %v610, %v606
    %v923 = vpack.c.b16 %v611, %v607
    %v924 = vpack.c.b16 %v616, %v612
    %v925 = vpack.c.b16 %v617, %v613
    %v926 = vpack.c.b16 %v618, %v614
    %v927 = vpack.c.b16 %v619, %v615
    %v928 = vpack.c.b16 %v624, %v620
    %v929 = vpack.c.b16 %v625, %v621
    %v930 = vpack.c.b16 %v626, %v622
    %v931 = vpack.c.b16 %v627, %v623
    %v932 = vpack.c.b16 %v632, %v628
    %v933 = vpack.c.b16 %v633, %v629
    %v934 = vpack.c.b16 %v634, %v630
    %v935 = vpack.c.b16 %v635, %v631
    %v936 = vpack.c.b16 %v640, %v636
    %v937 = vpack.c.b16 %v641, %v637
    %v938 = vpack.c.b16 %v642, %v638
    %v939 = vpack.c.b16 %v643, %v639
    %v940 = vpack.c.b16 %v648, %v644
    %v941 = vpack.c.b16 %v649, %v645
    %v942 = vpack.c.b16 %v650, %v646
    %v943 = vpack.c.b16 %v651, %v647
    %v944 = vpack.c.b16 %v656, %v652
    %v945 = vpack.c.b16 %v657, %v653
    %v946 = vpack.c.b16 %v658, %v654
    %v947 = vpack.c.b16 %v659, %v655
    %v948 = vpack.c.b16 %v664, %v660
    %v949 = vpack.c.b16 %v665, %v661
    %v950 = vpack.c.b16 %v666, %v662
    %v951 = vpack.c.b16 %v667, %v663
    %v952 = vpack.c.b16 %v672, %v668
    %v953 = vpack.c.b16 %v673, %v669
    %v954 = vpack.c.b16 %v674, %v670
    %v955 = vpack.c.b16 %v675, %v671
    %v956 = vpack.c.b16 %v680, %v676
    %v957 = vpack.c.b16 %v681, %v677
    %v958 = vpack.c.b16 %v682, %v678
    %v959 = vpack.c.b16 %v683, %v679
    %v960 = vpack.c.b16 %v688, %v684
    %v961 = vpack.c.b16 %v689, %v685
    %v962 = vpack.c.b16 %v690, %v686
    %v963 = vpack.c.b16 %v691, %v687
    %v964 = vpack.c.b16 %v696, %v692
    %v965 = vpack.c.b16 %v697, %v693
    %v966 = vpack.c.b16 %v698, %v694
    %v967 = vpack.c.b16 %v699, %v695
    %v968 = vpack.c.b16 %v704, %v700
    %v969 = vpack.c.b16 %v705, %v701
    %v970 = vpack.c.b16 %v706, %v702
    %v971 = vpack.c.b16 %v707, %v703
    %v972 = vpack.c.b16 %v712, %v708
    %v973 = vpack.c.b16 %v713, %v709
    %v974 = vpack.c.b16 %v714, %v710
    %v975 = vpack.c.b16 %v715, %v711
    %v976 = vpack.c.b16 %v720, %v716
    %v977 = vpack.c.b16 %v721, %v717
    %v978 = vpack.c.b16 %v722, %v718
    %v979 = vpack.c.b16 %v723, %v719
    %v980 = vpack.c.b16 %v728, %v724
    %v981 = vpack.c.b16 %v729, %v725
    %v982 = vpack.c.b16 %v730, %v726
    %v983 = vpack.c.b16 %v731, %v727
    %v984 = vpack.c.b16 %v736, %v732
    %v985 = vpack.c.b16 %v737, %v733
    %v986 = vpack.c.b16 %v738, %v734
    %v987 = vpack.c.b16 %v739, %v735
    %v988 = vpack.c.b16 %v744, %v740
    %v989 = vpack.c.b16 %v745, %v741
    %v990 = vpack.c.b16 %v746, %v742
    %v991 = vpack.c.b16 %v747, %v743
    %v992 = vpack.c.b16 %v752, %v748
    %v993 = vpack.c.b16 %v753, %v749
    %v994 = vpack.c.b16 %v754, %v750
    %v995 = vpack.c.b16 %v755, %v751
    %v996 = vpack.c.b16 %v760, %v756
    %v997 = vpack.c.b16 %v761, %v757
    %v998 = vpack.c.b16 %v762, %v758
    %v999 = vpack.c.b16 %v763, %v759
    %v1000 = vpack.c.b16 %v768, %v764
    %v1001 = vpack.c.b16 %v769, %v765
    %v1002 = vpack.c.b16 %v770, %v766
    %v1003 = vpack.c.b16 %v771, %v767
    %v1004 = vpack.c.b16 %v776, %v772
    %v1005 = vpack.c.b16 %v777, %v773
    %v1006 = vpack.c.b16 %v778, %v774
    %v1007 = vpack.c.b16 %v779, %v775
    %v1008 = vpack.c.b16 %v784, %v780
    %v1009 = vpack.c.b16 %v785, %v781
    %v1010 = vpack.c.b16 %v786, %v782
    %v1011 = vpack.c.b16 %v787, %v783
    %v1012 = vpack.c.b16 %v792, %v788
    %v1013 = vpack.c.b16 %v793, %v789
    %v1014 = vpack.c.b16 %v794, %v790
    %v1015 = vpack.c.b16 %v795, %v791
    %v1016 = vpack.c.b16 %v800, %v796
    %v1017 = vpack.c.b16 %v801, %v797
    %v1018 = vpack.c.b16 %v802, %v798
    %v1019 = vpack.c.b16 %v803, %v799
    %v1020 = vpack.c.b16 %v808, %v804
    %v1021 = vpack.c.b16 %v809, %v805
    %v1022 = vpack.c.b16 %v810, %v806
    %v1023 = vpack.c.b16 %v811, %v807
    %v1024 = vpack.c.b16 %v816, %v812
    %v1025 = vpack.c.b16 %v817, %v813
    %v1026 = vpack.c.b16 %v818, %v814
    %v1027 = vpack.c.b16 %v819, %v815
    %v1028 = vpack.c.b16 %v824, %v820
    %v1029 = vpack.c.b16 %v825, %v821
    %v1030 = vpack.c.b16 %v826, %v822
    %v1031 = vpack.c.b16 %v827, %v823
    %v1032 = vpack.c.b16 %v832, %v828
    %v1033 = vpack.c.b16 %v833, %v829
    %v1034 = vpack.c.b16 %v834, %v830
    %v1035 = vpack.c.b16 %v835, %v831
    %v1036 = vpack.c.b16 %v840, %v836
    %v1037 = vpack.c.b16 %v841, %v837
    %v1038 = vpack.c.b16 %v842, %v838
    %v1039 = vpack.c.b16 %v843, %v839
    %v1040 = vpack.c.b16 %v848, %v844
    %v1041 = vpack.c.b16 %v849, %v845
    %v1042 = vpack.c.b16 %v850, %v846
    %v1043 = vpack.c.b16 %v851, %v847
    %1236 = vmatpush.bf16.msra.mxu0 %v880
    %1237 = vmatpush.bf16.msra.mxu0 %v876
    %1238 = vmatpush.bf16.msra.mxu0 %v872
    %1239 = vmatpush.bf16.msra.mxu0 %v868
    %1240 = vmatpush.bf16.msra.mxu0 %v864
    %1241 = vmatpush.bf16.msra.mxu0 %v860
    %1242 = vmatpush.bf16.msra.mxu0 %v856
    %1243 = vmatpush.bf16.msra.mxu0 %v852
    %1244 = vmatmul.bf16.gmra.mxu0 %v68
    %v1245 = vpop.f32.mrf.mxu0
    %v1246 = vadd.f32 %v268, %v1245
    %v1247 = vpop.f32.mrf.mxu0
    %v1248 = vadd.f32 %v268, %v1247
    %1249 = vdwg.mxu0
    %1250 = vmatpush.bf16.msra.mxu0 %v912
    %1251 = vmatpush.bf16.msra.mxu0 %v908
    %1252 = vmatpush.bf16.msra.mxu0 %v904
    %1253 = vmatpush.bf16.msra.mxu0 %v900
    %1254 = vmatpush.bf16.msra.mxu0 %v896
    %1255 = vmatpush.bf16.msra.mxu0 %v892
    %1256 = vmatpush.bf16.msra.mxu0 %v888
    %1257 = vmatpush.bf16.msra.mxu0 %v884
    %1258 = vmatmul.bf16.gmra.mxu0 %v69
    %v1259 = vpop.f32.mrf.mxu0
    %v1260 = vadd.f32 %v1246, %v1259
    %v1261 = vpop.f32.mrf.mxu0
    %v1262 = vadd.f32 %v1248, %v1261
    %1263 = vdwg.mxu0
    %1264 = vmatpush.bf16.msra.mxu0 %v944
    %1265 = vmatpush.bf16.msra.mxu0 %v940
    %1266 = vmatpush.bf16.msra.mxu0 %v936
    %1267 = vmatpush.bf16.msra.mxu0 %v932
    %1268 = vmatpush.bf16.msra.mxu0 %v928
    %1269 = vmatpush.bf16.msra.mxu0 %v924
    %1270 = vmatpush.bf16.msra.mxu0 %v920
    %1271 = vmatpush.bf16.msra.mxu0 %v916
    %1272 = vmatmul.bf16.gmra.mxu0 %v70
    %v1273 = vpop.f32.mrf.mxu0
    %v1274 = vadd.f32 %v1260, %v1273
    %v1275 = vpop.f32.mrf.mxu0
    %v1276 = vadd.f32 %v1262, %v1275
    %1277 = vdwg.mxu0
    %1278 = vmatpush.bf16.msra.mxu0 %v976
    %1279 = vmatpush.bf16.msra.mxu0 %v972
    %1280 = vmatpush.bf16.msra.mxu0 %v968
    %1281 = vmatpush.bf16.msra.mxu0 %v964
    %1282 = vmatpush.bf16.msra.mxu0 %v960
    %1283 = vmatpush.bf16.msra.mxu0 %v956
    %1284 = vmatpush.bf16.msra.mxu0 %v952
    %1285 = vmatpush.bf16.msra.mxu0 %v948
    %1286 = vmatmul.bf16.gmra.mxu0 %v71
    %v1287 = vpop.f32.mrf.mxu0
    %v1288 = vadd.f32 %v1274, %v1287
    %v1289 = vpop.f32.mrf.mxu0
    %v1290 = vadd.f32 %v1276, %v1289
    %1291 = vdwg.mxu0
    %1292 = vmatpush.bf16.msra.mxu0 %v1008
    %1293 = vmatpush.bf16.msra.mxu0 %v1004
    %1294 = vmatpush.bf16.msra.mxu0 %v1000
    %1295 = vmatpush.bf16.msra.mxu0 %v996
    %1296 = vmatpush.bf16.msra.mxu0 %v992
    %1297 = vmatpush.bf16.msra.mxu0 %v988
    %1298 = vmatpush.bf16.msra.mxu0 %v984
    %1299 = vmatpush.bf16.msra.mxu0 %v980
    %1300 = vmatmul.bf16.gmra.mxu0 %v72
    %v1301 = vpop.f32.mrf.mxu0
    %v1302 = vadd.f32 %v1288, %v1301
    %v1303 = vpop.f32.mrf.mxu0
    %v1304 = vadd.f32 %v1290, %v1303
    %1305 = vdwg.mxu0
    %1306 = vmatpush.bf16.msra.mxu0 %v1040
    %1307 = vmatpush.bf16.msra.mxu0 %v1036
    %1308 = vmatpush.bf16.msra.mxu0 %v1032
    %1309 = vmatpush.bf16.msra.mxu0 %v1028
    %1310 = vmatpush.bf16.msra.mxu0 %v1024
    %1311 = vmatpush.bf16.msra.mxu0 %v1020
    %1312 = vmatpush.bf16.msra.mxu0 %v1016
    %1313 = vmatpush.bf16.msra.mxu0 %v1012
    %1314 = vmatmul.bf16.gmra.mxu0 %v73
    %v1315 = vpop.f32.mrf.mxu0
    %v1316 = vadd.f32 %v1302, %v1315
    %v1317 = vpop.f32.mrf.mxu0
    %v1318 = vadd.f32 %v1304, %v1317
    %1319 = vdwg.mxu0
    %1320 = vmatpush.bf16.msra.mxu0 %v881
    %1321 = vmatpush.bf16.msra.mxu0 %v877
    %1322 = vmatpush.bf16.msra.mxu0 %v873
    %1323 = vmatpush.bf16.msra.mxu0 %v869
    %1324 = vmatpush.bf16.msra.mxu0 %v865
    %1325 = vmatpush.bf16.msra.mxu0 %v861
    %1326 = vmatpush.bf16.msra.mxu0 %v857
    %1327 = vmatpush.bf16.msra.mxu0 %v853
    %1328 = vmatmul.bf16.gmra.mxu0 %v68
    %v1329 = vpop.f32.mrf.mxu0
    %v1330 = vadd.f32 %v269, %v1329
    %v1331 = vpop.f32.mrf.mxu0
    %v1332 = vadd.f32 %v269, %v1331
    %1333 = vdwg.mxu0
    %1334 = vmatpush.bf16.msra.mxu0 %v913
    %1335 = vmatpush.bf16.msra.mxu0 %v909
    %1336 = vmatpush.bf16.msra.mxu0 %v905
    %1337 = vmatpush.bf16.msra.mxu0 %v901
    %1338 = vmatpush.bf16.msra.mxu0 %v897
    %1339 = vmatpush.bf16.msra.mxu0 %v893
    %1340 = vmatpush.bf16.msra.mxu0 %v889
    %1341 = vmatpush.bf16.msra.mxu0 %v885
    %1342 = vmatmul.bf16.gmra.mxu0 %v69
    %v1343 = vpop.f32.mrf.mxu0
    %v1344 = vadd.f32 %v1330, %v1343
    %v1345 = vpop.f32.mrf.mxu0
    %v1346 = vadd.f32 %v1332, %v1345
    %1347 = vdwg.mxu0
    %1348 = vmatpush.bf16.msra.mxu0 %v945
    %1349 = vmatpush.bf16.msra.mxu0 %v941
    %1350 = vmatpush.bf16.msra.mxu0 %v937
    %1351 = vmatpush.bf16.msra.mxu0 %v933
    %1352 = vmatpush.bf16.msra.mxu0 %v929
    %1353 = vmatpush.bf16.msra.mxu0 %v925
    %1354 = vmatpush.bf16.msra.mxu0 %v921
    %1355 = vmatpush.bf16.msra.mxu0 %v917
    %1356 = vmatmul.bf16.gmra.mxu0 %v70
    %v1357 = vpop.f32.mrf.mxu0
    %v1358 = vadd.f32 %v1344, %v1357
    %v1359 = vpop.f32.mrf.mxu0
    %v1360 = vadd.f32 %v1346, %v1359
    %1361 = vdwg.mxu0
    %1362 = vmatpush.bf16.msra.mxu0 %v977
    %1363 = vmatpush.bf16.msra.mxu0 %v973
    %1364 = vmatpush.bf16.msra.mxu0 %v969
    %1365 = vmatpush.bf16.msra.mxu0 %v965
    %1366 = vmatpush.bf16.msra.mxu0 %v961
    %1367 = vmatpush.bf16.msra.mxu0 %v957
    %1368 = vmatpush.bf16.msra.mxu0 %v953
    %1369 = vmatpush.bf16.msra.mxu0 %v949
    %1370 = vmatmul.bf16.gmra.mxu0 %v71
    %v1371 = vpop.f32.mrf.mxu0
    %v1372 = vadd.f32 %v1358, %v1371
    %v1373 = vpop.f32.mrf.mxu0
    %v1374 = vadd.f32 %v1360, %v1373
    %1375 = vdwg.mxu0
    %1376 = vmatpush.bf16.msra.mxu0 %v1009
    %1377 = vmatpush.bf16.msra.mxu0 %v1005
    %1378 = vmatpush.bf16.msra.mxu0 %v1001
    %1379 = vmatpush.bf16.msra.mxu0 %v997
    %1380 = vmatpush.bf16.msra.mxu0 %v993
    %1381 = vmatpush.bf16.msra.mxu0 %v989
    %1382 = vmatpush.bf16.msra.mxu0 %v985
    %1383 = vmatpush.bf16.msra.mxu0 %v981
    %1384 = vmatmul.bf16.gmra.mxu0 %v72
    %v1385 = vpop.f32.mrf.mxu0
    %v1386 = vadd.f32 %v1372, %v1385
    %v1387 = vpop.f32.mrf.mxu0
    %v1388 = vadd.f32 %v1374, %v1387
    %1389 = vdwg.mxu0
    %1390 = vmatpush.bf16.msra.mxu0 %v1041
    %1391 = vmatpush.bf16.msra.mxu0 %v1037
    %1392 = vmatpush.bf16.msra.mxu0 %v1033
    %1393 = vmatpush.bf16.msra.mxu0 %v1029
    %1394 = vmatpush.bf16.msra.mxu0 %v1025
    %1395 = vmatpush.bf16.msra.mxu0 %v1021
    %1396 = vmatpush.bf16.msra.mxu0 %v1017
    %1397 = vmatpush.bf16.msra.mxu0 %v1013
    %1398 = vmatmul.bf16.gmra.mxu0 %v73
    %v1399 = vpop.f32.mrf.mxu0
    %v1400 = vadd.f32 %v1386, %v1399
    %v1401 = vpop.f32.mrf.mxu0
    %v1402 = vadd.f32 %v1388, %v1401
    %1403 = vdwg.mxu0
    %1404 = vmatpush.bf16.msra.mxu0 %v882
    %1405 = vmatpush.bf16.msra.mxu0 %v878
    %1406 = vmatpush.bf16.msra.mxu0 %v874
    %1407 = vmatpush.bf16.msra.mxu0 %v870
    %1408 = vmatpush.bf16.msra.mxu0 %v866
    %1409 = vmatpush.bf16.msra.mxu0 %v862
    %1410 = vmatpush.bf16.msra.mxu0 %v858
    %1411 = vmatpush.bf16.msra.mxu0 %v854
    %1412 = vmatmul.bf16.gmra.mxu0 %v68
    %v1413 = vpop.f32.mrf.mxu0
    %v1414 = vadd.f32 %v270, %v1413
    %v1415 = vpop.f32.mrf.mxu0
    %v1416 = vadd.f32 %v270, %v1415
    %1417 = vdwg.mxu0
    %1418 = vmatpush.bf16.msra.mxu0 %v914
    %1419 = vmatpush.bf16.msra.mxu0 %v910
    %1420 = vmatpush.bf16.msra.mxu0 %v906
    %1421 = vmatpush.bf16.msra.mxu0 %v902
    %1422 = vmatpush.bf16.msra.mxu0 %v898
    %1423 = vmatpush.bf16.msra.mxu0 %v894
    %1424 = vmatpush.bf16.msra.mxu0 %v890
    %1425 = vmatpush.bf16.msra.mxu0 %v886
    %1426 = vmatmul.bf16.gmra.mxu0 %v69
    %v1427 = vpop.f32.mrf.mxu0
    %v1428 = vadd.f32 %v1414, %v1427
    %v1429 = vpop.f32.mrf.mxu0
    %v1430 = vadd.f32 %v1416, %v1429
    %1431 = vdwg.mxu0
    %1432 = vmatpush.bf16.msra.mxu0 %v946
    %1433 = vmatpush.bf16.msra.mxu0 %v942
    %1434 = vmatpush.bf16.msra.mxu0 %v938
    %1435 = vmatpush.bf16.msra.mxu0 %v934
    %1436 = vmatpush.bf16.msra.mxu0 %v930
    %1437 = vmatpush.bf16.msra.mxu0 %v926
    %1438 = vmatpush.bf16.msra.mxu0 %v922
    %1439 = vmatpush.bf16.msra.mxu0 %v918
    %1440 = vmatmul.bf16.gmra.mxu0 %v70
    %v1441 = vpop.f32.mrf.mxu0
    %v1442 = vadd.f32 %v1428, %v1441
    %v1443 = vpop.f32.mrf.mxu0
    %v1444 = vadd.f32 %v1430, %v1443
    %1445 = vdwg.mxu0
    %1446 = vmatpush.bf16.msra.mxu0 %v978
    %1447 = vmatpush.bf16.msra.mxu0 %v974
    %1448 = vmatpush.bf16.msra.mxu0 %v970
    %1449 = vmatpush.bf16.msra.mxu0 %v966
    %1450 = vmatpush.bf16.msra.mxu0 %v962
    %1451 = vmatpush.bf16.msra.mxu0 %v958
    %1452 = vmatpush.bf16.msra.mxu0 %v954
    %1453 = vmatpush.bf16.msra.mxu0 %v950
    %1454 = vmatmul.bf16.gmra.mxu0 %v71
    %v1455 = vpop.f32.mrf.mxu0
    %v1456 = vadd.f32 %v1442, %v1455
    %v1457 = vpop.f32.mrf.mxu0
    %v1458 = vadd.f32 %v1444, %v1457
    %1459 = vdwg.mxu0
    %1460 = vmatpush.bf16.msra.mxu0 %v1010
    %1461 = vmatpush.bf16.msra.mxu0 %v1006
    %1462 = vmatpush.bf16.msra.mxu0 %v1002
    %1463 = vmatpush.bf16.msra.mxu0 %v998
    %1464 = vmatpush.bf16.msra.mxu0 %v994
    %1465 = vmatpush.bf16.msra.mxu0 %v990
    %1466 = vmatpush.bf16.msra.mxu0 %v986
    %1467 = vmatpush.bf16.msra.mxu0 %v982
    %1468 = vmatmul.bf16.gmra.mxu0 %v72
    %v1469 = vpop.f32.mrf.mxu0
    %v1470 = vadd.f32 %v1456, %v1469
    %v1471 = vpop.f32.mrf.mxu0
    %v1472 = vadd.f32 %v1458, %v1471
    %1473 = vdwg.mxu0
    %1474 = vmatpush.bf16.msra.mxu0 %v1042
    %1475 = vmatpush.bf16.msra.mxu0 %v1038
    %1476 = vmatpush.bf16.msra.mxu0 %v1034
    %1477 = vmatpush.bf16.msra.mxu0 %v1030
    %1478 = vmatpush.bf16.msra.mxu0 %v1026
    %1479 = vmatpush.bf16.msra.mxu0 %v1022
    %1480 = vmatpush.bf16.msra.mxu0 %v1018
    %1481 = vmatpush.bf16.msra.mxu0 %v1014
    %1482 = vmatmul.bf16.gmra.mxu0 %v73
    %v1483 = vpop.f32.mrf.mxu0
    %v1484 = vadd.f32 %v1470, %v1483
    %v1485 = vpop.f32.mrf.mxu0
    %v1486 = vadd.f32 %v1472, %v1485
    %1487 = vdwg.mxu0
    %1488 = vmatpush.bf16.msra.mxu0 %v883
    %1489 = vmatpush.bf16.msra.mxu0 %v879
    %1490 = vmatpush.bf16.msra.mxu0 %v875
    %1491 = vmatpush.bf16.msra.mxu0 %v871
    %1492 = vmatpush.bf16.msra.mxu0 %v867
    %1493 = vmatpush.bf16.msra.mxu0 %v863
    %1494 = vmatpush.bf16.msra.mxu0 %v859
    %1495 = vmatpush.bf16.msra.mxu0 %v855
    %1496 = vmatmul.bf16.gmra.mxu0 %v68
    %v1497 = vpop.f32.mrf.mxu0
    %v1498 = vadd.f32 %v271, %v1497
    %v1499 = vpop.f32.mrf.mxu0
    %v1500 = vadd.f32 %v271, %v1499
    %1501 = vdwg.mxu0
    %1502 = vmatpush.bf16.msra.mxu0 %v915
    %1503 = vmatpush.bf16.msra.mxu0 %v911
    %1504 = vmatpush.bf16.msra.mxu0 %v907
    %1505 = vmatpush.bf16.msra.mxu0 %v903
    %1506 = vmatpush.bf16.msra.mxu0 %v899
    %1507 = vmatpush.bf16.msra.mxu0 %v895
    %1508 = vmatpush.bf16.msra.mxu0 %v891
    %1509 = vmatpush.bf16.msra.mxu0 %v887
    %1510 = vmatmul.bf16.gmra.mxu0 %v69
    %v1511 = vpop.f32.mrf.mxu0
    %v1512 = vadd.f32 %v1498, %v1511
    %v1513 = vpop.f32.mrf.mxu0
    %v1514 = vadd.f32 %v1500, %v1513
    %1515 = vdwg.mxu0
    %1516 = vmatpush.bf16.msra.mxu0 %v947
    %1517 = vmatpush.bf16.msra.mxu0 %v943
    %1518 = vmatpush.bf16.msra.mxu0 %v939
    %1519 = vmatpush.bf16.msra.mxu0 %v935
    %1520 = vmatpush.bf16.msra.mxu0 %v931
    %1521 = vmatpush.bf16.msra.mxu0 %v927
    %1522 = vmatpush.bf16.msra.mxu0 %v923
    %1523 = vmatpush.bf16.msra.mxu0 %v919
    %1524 = vmatmul.bf16.gmra.mxu0 %v70
    %v1525 = vpop.f32.mrf.mxu0
    %v1526 = vadd.f32 %v1512, %v1525
    %v1527 = vpop.f32.mrf.mxu0
    %v1528 = vadd.f32 %v1514, %v1527
    %1529 = vdwg.mxu0
    %1530 = vmatpush.bf16.msra.mxu0 %v979
    %1531 = vmatpush.bf16.msra.mxu0 %v975
    %1532 = vmatpush.bf16.msra.mxu0 %v971
    %1533 = vmatpush.bf16.msra.mxu0 %v967
    %1534 = vmatpush.bf16.msra.mxu0 %v963
    %1535 = vmatpush.bf16.msra.mxu0 %v959
    %1536 = vmatpush.bf16.msra.mxu0 %v955
    %1537 = vmatpush.bf16.msra.mxu0 %v951
    %1538 = vmatmul.bf16.gmra.mxu0 %v71
    %v1539 = vpop.f32.mrf.mxu0
    %v1540 = vadd.f32 %v1526, %v1539
    %v1541 = vpop.f32.mrf.mxu0
    %v1542 = vadd.f32 %v1528, %v1541
    %1543 = vdwg.mxu0
    %1544 = vmatpush.bf16.msra.mxu0 %v1011
    %1545 = vmatpush.bf16.msra.mxu0 %v1007
    %1546 = vmatpush.bf16.msra.mxu0 %v1003
    %1547 = vmatpush.bf16.msra.mxu0 %v999
    %1548 = vmatpush.bf16.msra.mxu0 %v995
    %1549 = vmatpush.bf16.msra.mxu0 %v991
    %1550 = vmatpush.bf16.msra.mxu0 %v987
    %1551 = vmatpush.bf16.msra.mxu0 %v983
    %1552 = vmatmul.bf16.gmra.mxu0 %v72
    %v1553 = vpop.f32.mrf.mxu0
    %v1554 = vadd.f32 %v1540, %v1553
    %v1555 = vpop.f32.mrf.mxu0
    %v1556 = vadd.f32 %v1542, %v1555
    %1557 = vdwg.mxu0
    %1558 = vmatpush.bf16.msra.mxu0 %v1043
    %1559 = vmatpush.bf16.msra.mxu0 %v1039
    %1560 = vmatpush.bf16.msra.mxu0 %v1035
    %1561 = vmatpush.bf16.msra.mxu0 %v1031
    %1562 = vmatpush.bf16.msra.mxu0 %v1027
    %1563 = vmatpush.bf16.msra.mxu0 %v1023
    %1564 = vmatpush.bf16.msra.mxu0 %v1019
    %1565 = vmatpush.bf16.msra.mxu0 %v1015
    %1566 = vmatmul.bf16.gmra.mxu0 %v73
    %v1567 = vpop.f32.mrf.mxu0
    %v1568 = vadd.f32 %v1554, %v1567
    %v1569 = vpop.f32.mrf.mxu0
    %v1570 = vadd.f32 %v1556, %v1569
    %1571 = vdwg.mxu0
    %v1572 = vmax.f32 %v1316, 0.0
    %v1573 = vmax.f32 %v1400, 0.0
    %v1574 = vmax.f32 %v1484, 0.0
    %v1575 = vmax.f32 %v1568, 0.0
    %v1576 = vmax.f32 %v1318, 0.0
    %v1577 = vmax.f32 %v1402, 0.0
    %v1578 = vmax.f32 %v1486, 0.0
    %v1579 = vmax.f32 %v1570, 0.0
    %v1580 = vpack.c.bf16 %v1576, %v1572
    %v1581 = vpack.c.bf16 %v1577, %v1573
    %v1582 = vpack.c.bf16 %v1578, %v1574
    %v1583 = vpack.c.bf16 %v1579, %v1575
    %v1584 = vld [vmem:[%s2] sm:$0xff]
    %v1585 = vld [vmem:[%s2 + $0x8] sm:$0xff]
    %v1586 = vld [vmem:[%s2 + $0x10] sm:$0xff]
    %v1587 = vld [vmem:[%s2 + $0x18] sm:$0xff]
    %v1588 = vld [vmem:[%s2 + $0x20] sm:$0xff]
    %v1589 = vld [vmem:[%s2 + $0x28] sm:$0xff]
    %v1590 = vld [vmem:[%s2 + $0x30] sm:$0xff]
    %v1591 = vld [vmem:[%s2 + $0x38] sm:$0xff]
    %v1592 = vld [vmem:[%s2 + $0x40] sm:$0xff]
    %v1593 = vld [vmem:[%s2 + $0x48] sm:$0xff]
    %v1594 = vld [vmem:[%s2 + $0x50] sm:$0xff]
    %v1595 = vld [vmem:[%s2 + $0x58] sm:$0xff]
    %v1596 = vld [vmem:[%s2 + $0x60] sm:$0xff]
    %v1597 = vld [vmem:[%s2 + $0x68] sm:$0xff]
    %v1598 = vld [vmem:[%s2 + $0x70] sm:$0xff]
    %v1599 = vld [vmem:[%s2 + $0x78] sm:$0xff]
    %v1600 = vld [vmem:[%s2 + $0x80] sm:$0xff]
    %v1601 = vld [vmem:[%s2 + $0x88] sm:$0xff]
    %v1602 = vld [vmem:[%s2 + $0x90] sm:$0xff]
    %v1603 = vld [vmem:[%s2 + $0x98] sm:$0xff]
    %v1604 = vld [vmem:[%s2 + $0xa0] sm:$0xff]
    %v1605 = vld [vmem:[%s2 + $0xa8] sm:$0xff]
    %v1606 = vld [vmem:[%s2 + $0xb0] sm:$0xff]
    %v1607 = vld [vmem:[%s2 + $0xb8] sm:$0xff]
    %v1608 = vld [vmem:[%s2 + $0xc0] sm:$0xff]
    %v1609 = vld [vmem:[%s2 + $0xc8] sm:$0xff]
    %v1610 = vld [vmem:[%s2 + $0xd0] sm:$0xff]
    %v1611 = vld [vmem:[%s2 + $0xd8] sm:$0xff]
    %v1612 = vld [vmem:[%s2 + $0xe0] sm:$0xff]
    %v1613 = vld [vmem:[%s2 + $0xe8] sm:$0xff]
    %v1614 = vld [vmem:[%s2 + $0xf0] sm:$0xff]
    %v1615 = vld [vmem:[%s2 + $0xf8] sm:$0xff]
    %v1616 = vld [vmem:[%s2 + $0x100] sm:$0xff]
    %v1617 = vld [vmem:[%s2 + $0x108] sm:$0xff]
    %v1618 = vld [vmem:[%s2 + $0x110] sm:$0xff]
    %v1619 = vld [vmem:[%s2 + $0x118] sm:$0xff]
    %v1620 = vld [vmem:[%s2 + $0x120] sm:$0xff]
    %v1621 = vld [vmem:[%s2 + $0x128] sm:$0xff]
    %v1622 = vld [vmem:[%s2 + $0x130] sm:$0xff]
    %v1623 = vld [vmem:[%s2 + $0x138] sm:$0xff]
    %v1624 = vld [vmem:[%s2 + $0x140] sm:$0xff]
    %v1625 = vld [vmem:[%s2 + $0x148] sm:$0xff]
    %v1626 = vld [vmem:[%s2 + $0x150] sm:$0xff]
    %v1627 = vld [vmem:[%s2 + $0x158] sm:$0xff]
    %v1628 = vld [vmem:[%s2 + $0x160] sm:$0xff]
    %v1629 = vld [vmem:[%s2 + $0x168] sm:$0xff]
    %v1630 = vld [vmem:[%s2 + $0x170] sm:$0xff]
    %v1631 = vld [vmem:[%s2 + $0x178] sm:$0xff]
    %v1632 = vld [vmem:[%s2 + $0x180] sm:$0xff]
    %v1633 = vld [vmem:[%s2 + $0x188] sm:$0xff]
    %v1634 = vld [vmem:[%s2 + $0x190] sm:$0xff]
    %v1635 = vld [vmem:[%s2 + $0x198] sm:$0xff]
    %v1636 = vld [vmem:[%s2 + $0x1a0] sm:$0xff]
    %v1637 = vld [vmem:[%s2 + $0x1a8] sm:$0xff]
    %v1638 = vld [vmem:[%s2 + $0x1b0] sm:$0xff]
    %v1639 = vld [vmem:[%s2 + $0x1b8] sm:$0xff]
    %v1640 = vld [vmem:[%s2 + $0x1c0] sm:$0xff]
    %v1641 = vld [vmem:[%s2 + $0x1c8] sm:$0xff]
    %v1642 = vld [vmem:[%s2 + $0x1d0] sm:$0xff]
    %v1643 = vld [vmem:[%s2 + $0x1d8] sm:$0xff]
    %v1644 = vld [vmem:[%s2 + $0x1e0] sm:$0xff]
    %v1645 = vld [vmem:[%s2 + $0x1e8] sm:$0xff]
    %v1646 = vld [vmem:[%s2 + $0x1f0] sm:$0xff]
    %v1647 = vld [vmem:[%s2 + $0x1f8] sm:$0xff]
    %v1648 = vld [vmem:[#allocation4 + $0x4] sm:$0x3]
    %v1650 = vperm.slane %v1648, 0
    %v1651 = vperm.slane %v1648, 1
    %v1718 = vunpack.c.l.b16 %v1584
    %v1719 = vunpack.c.h.b16 %v1584
    %v1720 = vunpack.c.l.b16 %v1585
    %v1721 = vunpack.c.h.b16 %v1585
    %v1722 = vunpack.c.l.b16 %v1586
    %v1723 = vunpack.c.h.b16 %v1586
    %v1724 = vunpack.c.l.b16 %v1587
    %v1725 = vunpack.c.h.b16 %v1587
    %v1726 = vunpack.c.l.b16 %v1588
    %v1727 = vunpack.c.h.b16 %v1588
    %v1728 = vunpack.c.l.b16 %v1589
    %v1729 = vunpack.c.h.b16 %v1589
    %v1730 = vunpack.c.l.b16 %v1590
    %v1731 = vunpack.c.h.b16 %v1590
    %v1732 = vunpack.c.l.b16 %v1591
    %v1733 = vunpack.c.h.b16 %v1591
    %v1734 = vunpack.c.l.b16 %v1592
    %v1735 = vunpack.c.h.b16 %v1592
    %v1736 = vunpack.c.l.b16 %v1593
    %v1737 = vunpack.c.h.b16 %v1593
    %v1738 = vunpack.c.l.b16 %v1594
    %v1739 = vunpack.c.h.b16 %v1594
    %v1740 = vunpack.c.l.b16 %v1595
    %v1741 = vunpack.c.h.b16 %v1595
    %v1742 = vunpack.c.l.b16 %v1596
    %v1743 = vunpack.c.h.b16 %v1596
    %v1744 = vunpack.c.l.b16 %v1597
    %v1745 = vunpack.c.h.b16 %v1597
    %v1746 = vunpack.c.l.b16 %v1598
    %v1747 = vunpack.c.h.b16 %v1598
    %v1748 = vunpack.c.l.b16 %v1599
    %v1749 = vunpack.c.h.b16 %v1599
    %v1750 = vunpack.c.l.b16 %v1600
    %v1751 = vunpack.c.h.b16 %v1600
    %v1752 = vunpack.c.l.b16 %v1601
    %v1753 = vunpack.c.h.b16 %v1601
    %v1754 = vunpack.c.l.b16 %v1602
    %v1755 = vunpack.c.h.b16 %v1602
    %v1756 = vunpack.c.l.b16 %v1603
    %v1757 = vunpack.c.h.b16 %v1603
    %v1758 = vunpack.c.l.b16 %v1604
    %v1759 = vunpack.c.h.b16 %v1604
    %v1760 = vunpack.c.l.b16 %v1605
    %v1761 = vunpack.c.h.b16 %v1605
    %v1762 = vunpack.c.l.b16 %v1606
    %v1763 = vunpack.c.h.b16 %v1606
    %v1764 = vunpack.c.l.b16 %v1607
    %v1765 = vunpack.c.h.b16 %v1607
    %v1766 = vunpack.c.l.b16 %v1608
    %v1767 = vunpack.c.h.b16 %v1608
    %v1768 = vunpack.c.l.b16 %v1609
    %v1769 = vunpack.c.h.b16 %v1609
    %v1770 = vunpack.c.l.b16 %v1610
    %v1771 = vunpack.c.h.b16 %v1610
    %v1772 = vunpack.c.l.b16 %v1611
    %v1773 = vunpack.c.h.b16 %v1611
    %v1774 = vunpack.c.l.b16 %v1612
    %v1775 = vunpack.c.h.b16 %v1612
    %v1776 = vunpack.c.l.b16 %v1613
    %v1777 = vunpack.c.h.b16 %v1613
    %v1778 = vunpack.c.l.b16 %v1614
    %v1779 = vunpack.c.h.b16 %v1614
    %v1780 = vunpack.c.l.b16 %v1615
    %v1781 = vunpack.c.h.b16 %v1615
    %v1782 = vunpack.c.l.b16 %v1616
    %v1783 = vunpack.c.h.b16 %v1616
    %v1784 = vunpack.c.l.b16 %v1617
    %v1785 = vunpack.c.h.b16 %v1617
    %v1786 = vunpack.c.l.b16 %v1618
    %v1787 = vunpack.c.h.b16 %v1618
    %v1788 = vunpack.c.l.b16 %v1619
    %v1789 = vunpack.c.h.b16 %v1619
    %v1790 = vunpack.c.l.b16 %v1620
    %v1791 = vunpack.c.h.b16 %v1620
    %v1792 = vunpack.c.l.b16 %v1621
    %v1793 = vunpack.c.h.b16 %v1621
    %v1794 = vunpack.c.l.b16 %v1622
    %v1795 = vunpack.c.h.b16 %v1622
    %v1796 = vunpack.c.l.b16 %v1623
    %v1797 = vunpack.c.h.b16 %v1623
    %v1798 = vunpack.c.l.b16 %v1624
    %v1799 = vunpack.c.h.b16 %v1624
    %v1800 = vunpack.c.l.b16 %v1625
    %v1801 = vunpack.c.h.b16 %v1625
    %v1802 = vunpack.c.l.b16 %v1626
    %v1803 = vunpack.c.h.b16 %v1626
    %v1804 = vunpack.c.l.b16 %v1627
    %v1805 = vunpack.c.h.b16 %v1627
    %v1806 = vunpack.c.l.b16 %v1628
    %v1807 = vunpack.c.h.b16 %v1628
    %v1808 = vunpack.c.l.b16 %v1629
    %v1809 = vunpack.c.h.b16 %v1629
    %v1810 = vunpack.c.l.b16 %v1630
    %v1811 = vunpack.c.h.b16 %v1630
    %v1812 = vunpack.c.l.b16 %v1631
    %v1813 = vunpack.c.h.b16 %v1631
    %v1814 = vunpack.c.l.b16 %v1632
    %v1815 = vunpack.c.h.b16 %v1632
    %v1816 = vunpack.c.l.b16 %v1633
    %v1817 = vunpack.c.h.b16 %v1633
    %v1818 = vunpack.c.l.b16 %v1634
    %v1819 = vunpack.c.h.b16 %v1634
    %v1820 = vunpack.c.l.b16 %v1635
    %v1821 = vunpack.c.h.b16 %v1635
    %v1822 = vunpack.c.l.b16 %v1636
    %v1823 = vunpack.c.h.b16 %v1636
    %v1824 = vunpack.c.l.b16 %v1637
    %v1825 = vunpack.c.h.b16 %v1637
    %v1826 = vunpack.c.l.b16 %v1638
    %v1827 = vunpack.c.h.b16 %v1638
    %v1828 = vunpack.c.l.b16 %v1639
    %v1829 = vunpack.c.h.b16 %v1639
    %v1830 = vunpack.c.l.b16 %v1640
    %v1831 = vunpack.c.h.b16 %v1640
    %v1832 = vunpack.c.l.b16 %v1641
    %v1833 = vunpack.c.h.b16 %v1641
    %v1834 = vunpack.c.l.b16 %v1642
    %v1835 = vunpack.c.h.b16 %v1642
    %v1836 = vunpack.c.l.b16 %v1643
    %v1837 = vunpack.c.h.b16 %v1643
    %v1838 = vunpack.c.l.b16 %v1644
    %v1839 = vunpack.c.h.b16 %v1644
    %v1840 = vunpack.c.l.b16 %v1645
    %v1841 = vunpack.c.h.b16 %v1645
    %v1842 = vunpack.c.l.b16 %v1646
    %v1843 = vunpack.c.h.b16 %v1646
    %v1844 = vunpack.c.l.b16 %v1647
    %v1845 = vunpack.c.h.b16 %v1647
    %v1846 = vpack.c.b16 %v1720, %v1718
    %v1847 = vpack.c.b16 %v1721, %v1719
    %v1848 = vpack.c.b16 %v1724, %v1722
    %v1849 = vpack.c.b16 %v1725, %v1723
    %v1850 = vpack.c.b16 %v1728, %v1726
    %v1851 = vpack.c.b16 %v1729, %v1727
    %v1852 = vpack.c.b16 %v1732, %v1730
    %v1853 = vpack.c.b16 %v1733, %v1731
    %v1854 = vpack.c.b16 %v1736, %v1734
    %v1855 = vpack.c.b16 %v1737, %v1735
    %v1856 = vpack.c.b16 %v1740, %v1738
    %v1857 = vpack.c.b16 %v1741, %v1739
    %v1858 = vpack.c.b16 %v1744, %v1742
    %v1859 = vpack.c.b16 %v1745, %v1743
    %v1860 = vpack.c.b16 %v1748, %v1746
    %v1861 = vpack.c.b16 %v1749, %v1747
    %v1862 = vpack.c.b16 %v1752, %v1750
    %v1863 = vpack.c.b16 %v1753, %v1751
    %v1864 = vpack.c.b16 %v1756, %v1754
    %v1865 = vpack.c.b16 %v1757, %v1755
    %v1866 = vpack.c.b16 %v1760, %v1758
    %v1867 = vpack.c.b16 %v1761, %v1759
    %v1868 = vpack.c.b16 %v1764, %v1762
    %v1869 = vpack.c.b16 %v1765, %v1763
    %v1870 = vpack.c.b16 %v1768, %v1766
    %v1871 = vpack.c.b16 %v1769, %v1767
    %v1872 = vpack.c.b16 %v1772, %v1770
    %v1873 = vpack.c.b16 %v1773, %v1771
    %v1874 = vpack.c.b16 %v1776, %v1774
    %v1875 = vpack.c.b16 %v1777, %v1775
    %v1876 = vpack.c.b16 %v1780, %v1778
    %v1877 = vpack.c.b16 %v1781, %v1779
    %v1878 = vpack.c.b16 %v1784, %v1782
    %v1879 = vpack.c.b16 %v1785, %v1783
    %v1880 = vpack.c.b16 %v1788, %v1786
    %v1881 = vpack.c.b16 %v1789, %v1787
    %v1882 = vpack.c.b16 %v1792, %v1790
    %v1883 = vpack.c.b16 %v1793, %v1791
    %v1884 = vpack.c.b16 %v1796, %v1794
    %v1885 = vpack.c.b16 %v1797, %v1795
    %v1886 = vpack.c.b16 %v1800, %v1798
    %v1887 = vpack.c.b16 %v1801, %v1799
    %v1888 = vpack.c.b16 %v1804, %v1802
    %v1889 = vpack.c.b16 %v1805, %v1803
    %v1890 = vpack.c.b16 %v1808, %v1806
    %v1891 = vpack.c.b16 %v1809, %v1807
    %v1892 = vpack.c.b16 %v1812, %v1810
    %v1893 = vpack.c.b16 %v1813, %v1811
    %v1894 = vpack.c.b16 %v1816, %v1814
    %v1895 = vpack.c.b16 %v1817, %v1815
    %v1896 = vpack.c.b16 %v1820, %v1818
    %v1897 = vpack.c.b16 %v1821, %v1819
    %v1898 = vpack.c.b16 %v1824, %v1822
    %v1899 = vpack.c.b16 %v1825, %v1823
    %v1900 = vpack.c.b16 %v1828, %v1826
    %v1901 = vpack.c.b16 %v1829, %v1827
    %v1902 = vpack.c.b16 %v1832, %v1830
    %v1903 = vpack.c.b16 %v1833, %v1831
    %v1904 = vpack.c.b16 %v1836, %v1834
    %v1905 = vpack.c.b16 %v1837, %v1835
    %v1906 = vpack.c.b16 %v1840, %v1838
    %v1907 = vpack.c.b16 %v1841, %v1839
    %v1908 = vpack.c.b16 %v1844, %v1842
    %v1909 = vpack.c.b16 %v1845, %v1843
    %1974 = vmatpush.bf16.msra.mxu0 %v1860
    %1975 = vmatpush.bf16.msra.mxu0 %v1858
    %1976 = vmatpush.bf16.msra.mxu0 %v1856
    %1977 = vmatpush.bf16.msra.mxu0 %v1854
    %1978 = vmatpush.bf16.msra.mxu0 %v1852
    %1979 = vmatpush.bf16.msra.mxu0 %v1850
    %1980 = vmatpush.bf16.msra.mxu0 %v1848
    %1981 = vmatpush.bf16.msra.mxu0 %v1846
    %1982 = vmatmul.bf16.gmra.mxu0 %v1580
    %v1983 = vpop.f32.mrf.mxu0
    %v1984 = vadd.f32 %v1650, %v1983
    %v1985 = vpop.f32.mrf.mxu0
    %v1986 = vadd.f32 %v1650, %v1985
    %1987 = vdwg.mxu0
    %1988 = vmatpush.bf16.msra.mxu0 %v1876
    %1989 = vmatpush.bf16.msra.mxu0 %v1874
    %1990 = vmatpush.bf16.msra.mxu0 %v1872
    %1991 = vmatpush.bf16.msra.mxu0 %v1870
    %1992 = vmatpush.bf16.msra.mxu0 %v1868
    %1993 = vmatpush.bf16.msra.mxu0 %v1866
    %1994 = vmatpush.bf16.msra.mxu0 %v1864
    %1995 = vmatpush.bf16.msra.mxu0 %v1862
    %1996 = vmatmul.bf16.gmra.mxu0 %v1581
    %v1997 = vpop.f32.mrf.mxu0
    %v1998 = vadd.f32 %v1984, %v1997
    %v1999 = vpop.f32.mrf.mxu0
    %v2000 = vadd.f32 %v1986, %v1999
    %2001 = vdwg.mxu0
    %2002 = vmatpush.bf16.msra.mxu0 %v1892
    %2003 = vmatpush.bf16.msra.mxu0 %v1890
    %2004 = vmatpush.bf16.msra.mxu0 %v1888
    %2005 = vmatpush.bf16.msra.mxu0 %v1886
    %2006 = vmatpush.bf16.msra.mxu0 %v1884
    %2007 = vmatpush.bf16.msra.mxu0 %v1882
    %2008 = vmatpush.bf16.msra.mxu0 %v1880
    %2009 = vmatpush.bf16.msra.mxu0 %v1878
    %2010 = vmatmul.bf16.gmra.mxu0 %v1582
    %v2011 = vpop.f32.mrf.mxu0
    %v2012 = vadd.f32 %v1998, %v2011
    %v2013 = vpop.f32.mrf.mxu0
    %v2014 = vadd.f32 %v2000, %v2013
    %2015 = vdwg.mxu0
    %2016 = vmatpush.bf16.msra.mxu0 %v1908
    %2017 = vmatpush.bf16.msra.mxu0 %v1906
    %2018 = vmatpush.bf16.msra.mxu0 %v1904
    %2019 = vmatpush.bf16.msra.mxu0 %v1902
    %2020 = vmatpush.bf16.msra.mxu0 %v1900
    %2021 = vmatpush.bf16.msra.mxu0 %v1898
    %2022 = vmatpush.bf16.msra.mxu0 %v1896
    %2023 = vmatpush.bf16.msra.mxu0 %v1894
    %2024 = vmatmul.bf16.gmra.mxu0 %v1583
    %v2025 = vpop.f32.mrf.mxu0
    %v2026 = vadd.f32 %v2012, %v2025
    %v2027 = vpop.f32.mrf.mxu0
    %v2028 = vadd.f32 %v2014, %v2027
    %2029 = vdwg.mxu0
    %2030 = vmatpush.bf16.msra.mxu0 %v1861
    %2031 = vmatpush.bf16.msra.mxu0 %v1859
    %2032 = vmatpush.bf16.msra.mxu0 %v1857
    %2033 = vmatpush.bf16.msra.mxu0 %v1855
    %2034 = vmatpush.bf16.msra.mxu0 %v1853
    %2035 = vmatpush.bf16.msra.mxu0 %v1851
    %2036 = vmatpush.bf16.msra.mxu0 %v1849
    %2037 = vmatpush.bf16.msra.mxu0 %v1847
    %2038 = vmatmul.bf16.gmra.mxu0 %v1580
    %v2039 = vpop.f32.mrf.mxu0
    %v2040 = vadd.f32 %v1651, %v2039
    %v2041 = vpop.f32.mrf.mxu0
    %v2042 = vadd.f32 %v1651, %v2041
    %2043 = vdwg.mxu0
    %2044 = vmatpush.bf16.msra.mxu0 %v1877
    %2045 = vmatpush.bf16.msra.mxu0 %v1875
    %2046 = vmatpush.bf16.msra.mxu0 %v1873
    %2047 = vmatpush.bf16.msra.mxu0 %v1871
    %2048 = vmatpush.bf16.msra.mxu0 %v1869
    %2049 = vmatpush.bf16.msra.mxu0 %v1867
    %2050 = vmatpush.bf16.msra.mxu0 %v1865
    %2051 = vmatpush.bf16.msra.mxu0 %v1863
    %2052 = vmatmul.bf16.gmra.mxu0 %v1581
    %v2053 = vpop.f32.mrf.mxu0
    %v2054 = vadd.f32 %v2040, %v2053
    %v2055 = vpop.f32.mrf.mxu0
    %v2056 = vadd.f32 %v2042, %v2055
    %2057 = vdwg.mxu0
    %2058 = vmatpush.bf16.msra.mxu0 %v1893
    %2059 = vmatpush.bf16.msra.mxu0 %v1891
    %2060 = vmatpush.bf16.msra.mxu0 %v1889
    %2061 = vmatpush.bf16.msra.mxu0 %v1887
    %2062 = vmatpush.bf16.msra.mxu0 %v1885
    %2063 = vmatpush.bf16.msra.mxu0 %v1883
    %2064 = vmatpush.bf16.msra.mxu0 %v1881
    %2065 = vmatpush.bf16.msra.mxu0 %v1879
    %2066 = vmatmul.bf16.gmra.mxu0 %v1582
    %v2067 = vpop.f32.mrf.mxu0
    %v2068 = vadd.f32 %v2054, %v2067
    %v2069 = vpop.f32.mrf.mxu0
    %v2070 = vadd.f32 %v2056, %v2069
    %2071 = vdwg.mxu0
    %2072 = vmatpush.bf16.msra.mxu0 %v1909
    %2073 = vmatpush.bf16.msra.mxu0 %v1907
    %2074 = vmatpush.bf16.msra.mxu0 %v1905
    %2075 = vmatpush.bf16.msra.mxu0 %v1903
    %2076 = vmatpush.bf16.msra.mxu0 %v1901
    %2077 = vmatpush.bf16.msra.mxu0 %v1899
    %2078 = vmatpush.bf16.msra.mxu0 %v1897
    %2079 = vmatpush.bf16.msra.mxu0 %v1895
    %2080 = vmatmul.bf16.gmra.mxu0 %v1583
    %v2081 = vpop.f32.mrf.mxu0
    %v2082 = vadd.f32 %v2068, %v2081
    %v2083 = vpop.f32.mrf.mxu0
    %v2084 = vadd.f32 %v2070, %v2083
    %2085 = vdwg.mxu0
    %v2086 = vmax.f32 %v2026, 0.0
    %v2087 = vmax.f32 %v2082, 0.0
    %v2088 = vmax.f32 %v2028, 0.0
    %v2089 = vmax.f32 %v2084, 0.0
    %v2090 = vpack.c.bf16 %v2088, %v2086
    %v2091 = vpack.c.bf16 %v2089, %v2087
    %v2092 = vld [vmem:[%s3] sm:$0xf]
    %v2093 = vld [vmem:[%s3 + $0x4] sm:$0xf]
    %v2094 = vld [vmem:[%s3 + $0x8] sm:$0xf]
    %v2095 = vld [vmem:[%s3 + $0xc] sm:$0xf]
    %v2096 = vld [vmem:[%s3 + $0x10] sm:$0xf]
    %v2097 = vld [vmem:[%s3 + $0x14] sm:$0xf]
    %v2098 = vld [vmem:[%s3 + $0x18] sm:$0xf]
    %v2099 = vld [vmem:[%s3 + $0x1c] sm:$0xf]
    %v2100 = vld [vmem:[%s3 + $0x20] sm:$0xf]
    %v2101 = vld [vmem:[%s3 + $0x24] sm:$0xf]
    %v2102 = vld [vmem:[%s3 + $0x28] sm:$0xf]
    %v2103 = vld [vmem:[%s3 + $0x2c] sm:$0xf]
    %v2104 = vld [vmem:[%s3 + $0x30] sm:$0xf]
    %v2105 = vld [vmem:[%s3 + $0x34] sm:$0xf]
    %v2106 = vld [vmem:[%s3 + $0x38] sm:$0xf]
    %v2107 = vld [vmem:[%s3 + $0x3c] sm:$0xf]
    %v2108 = vld [vmem:[%s3 + $0x40] sm:$0xf]
    %v2109 = vld [vmem:[%s3 + $0x44] sm:$0xf]
    %v2110 = vld [vmem:[%s3 + $0x48] sm:$0xf]
    %v2111 = vld [vmem:[%s3 + $0x4c] sm:$0xf]
    %v2112 = vld [vmem:[%s3 + $0x50] sm:$0xf]
    %v2113 = vld [vmem:[%s3 + $0x54] sm:$0xf]
    %v2114 = vld [vmem:[%s3 + $0x58] sm:$0xf]
    %v2115 = vld [vmem:[%s3 + $0x5c] sm:$0xf]
    %v2116 = vld [vmem:[%s3 + $0x60] sm:$0xf]
    %v2117 = vld [vmem:[%s3 + $0x64] sm:$0xf]
    %v2118 = vld [vmem:[%s3 + $0x68] sm:$0xf]
    %v2119 = vld [vmem:[%s3 + $0x6c] sm:$0xf]
    %v2120 = vld [vmem:[%s3 + $0x70] sm:$0xf]
    %v2121 = vld [vmem:[%s3 + $0x74] sm:$0xf]
    %v2122 = vld [vmem:[%s3 + $0x78] sm:$0xf]
    %v2123 = vld [vmem:[%s3 + $0x7c] sm:$0xf]
    %v2124 = vld [vmem:[#allocation4 + $0x6] sm:$0x1]
    %v2126 = vperm.slane %v2124, 0
    %v2160 = vunpack.c.l.b16 %v2092
    %v2161 = vunpack.c.l.b16 %v2093
    %v2162 = vunpack.c.l.b16 %v2094
    %v2163 = vunpack.c.l.b16 %v2095
    %v2164 = vunpack.c.l.b16 %v2096
    %v2165 = vunpack.c.l.b16 %v2097
    %v2166 = vunpack.c.l.b16 %v2098
    %v2167 = vunpack.c.l.b16 %v2099
    %v2168 = vunpack.c.l.b16 %v2100
    %v2169 = vunpack.c.l.b16 %v2101
    %v2170 = vunpack.c.l.b16 %v2102
    %v2171 = vunpack.c.l.b16 %v2103
    %v2172 = vunpack.c.l.b16 %v2104
    %v2173 = vunpack.c.l.b16 %v2105
    %v2174 = vunpack.c.l.b16 %v2106
    %v2175 = vunpack.c.l.b16 %v2107
    %v2176 = vunpack.c.l.b16 %v2108
    %v2177 = vunpack.c.l.b16 %v2109
    %v2178 = vunpack.c.l.b16 %v2110
    %v2179 = vunpack.c.l.b16 %v2111
    %v2180 = vunpack.c.l.b16 %v2112
    %v2181 = vunpack.c.l.b16 %v2113
    %v2182 = vunpack.c.l.b16 %v2114
    %v2183 = vunpack.c.l.b16 %v2115
    %v2184 = vunpack.c.l.b16 %v2116
    %v2185 = vunpack.c.l.b16 %v2117
    %v2186 = vunpack.c.l.b16 %v2118
    %v2187 = vunpack.c.l.b16 %v2119
    %v2188 = vunpack.c.l.b16 %v2120
    %v2189 = vunpack.c.l.b16 %v2121
    %v2190 = vunpack.c.l.b16 %v2122
    %v2191 = vunpack.c.l.b16 %v2123
    %v2192 = vpack.c.b16 %v2161, %v2160
    %v2193 = vpack.c.b16 %v2163, %v2162
    %v2194 = vpack.c.b16 %v2165, %v2164
    %v2195 = vpack.c.b16 %v2167, %v2166
    %v2196 = vpack.c.b16 %v2169, %v2168
    %v2197 = vpack.c.b16 %v2171, %v2170
    %v2198 = vpack.c.b16 %v2173, %v2172
    %v2199 = vpack.c.b16 %v2175, %v2174
    %v2200 = vpack.c.b16 %v2177, %v2176
    %v2201 = vpack.c.b16 %v2179, %v2178
    %v2202 = vpack.c.b16 %v2181, %v2180
    %v2203 = vpack.c.b16 %v2183, %v2182
    %v2204 = vpack.c.b16 %v2185, %v2184
    %v2205 = vpack.c.b16 %v2187, %v2186
    %v2206 = vpack.c.b16 %v2189, %v2188
    %v2207 = vpack.c.b16 %v2191, %v2190
    %2224 = vmatpush.bf16.msra.mxu0 %v2199
    %2225 = vmatpush.bf16.msra.mxu0 %v2198
    %2226 = vmatpush.bf16.msra.mxu0 %v2197
    %2227 = vmatpush.bf16.msra.mxu0 %v2196
    %2228 = vmatpush.bf16.msra.mxu0 %v2195
    %2229 = vmatpush.bf16.msra.mxu0 %v2194
    %2230 = vmatpush.bf16.msra.mxu0 %v2193
    %2231 = vmatpush.bf16.msra.mxu0 %v2192
    %2232 = vmatmul.bf16.gmra.mxu0 %v2090
    %v2233 = vpop.f32.mrf.mxu0
    %v2234 = vadd.f32 %v2126, %v2233
    %v2235 = vpop.f32.mrf.mxu0
    %v2236 = vadd.f32 %v2126, %v2235
    %2237 = vdwg.mxu0
    %2238 = vmatpush.bf16.msra.mxu0 %v2207
    %2239 = vmatpush.bf16.msra.mxu0 %v2206
    %2240 = vmatpush.bf16.msra.mxu0 %v2205
    %2241 = vmatpush.bf16.msra.mxu0 %v2204
    %2242 = vmatpush.bf16.msra.mxu0 %v2203
    %2243 = vmatpush.bf16.msra.mxu0 %v2202
    %2244 = vmatpush.bf16.msra.mxu0 %v2201
    %2245 = vmatpush.bf16.msra.mxu0 %v2200
    %2246 = vmatmul.bf16.gmra.mxu0 %v2091
    %v2247 = vpop.f32.mrf.mxu0
    %v2248 = vadd.f32 %v2234, %v2247
    %v2249 = vpop.f32.mrf.mxu0
    %v2250 = vadd.f32 %v2236, %v2249
    %2251 = vdwg.mxu0
    %v2252 = vmax.f32 %v2248, 0.0
    %v2253 = vmax.f32 %v2250, 0.0
    %v2254 = vpack.c.bf16 %v2253, %v2252
    %v2255 = vld [vmem:[%s4] sm:$0xf]
    %v2256 = vld [vmem:[%s4 + $0x4] sm:$0xf]
    %v2257 = vld [vmem:[%s4 + $0x8] sm:$0xf]
    %v2258 = vld [vmem:[%s4 + $0xc] sm:$0xf]
    %v2259 = vld [vmem:[%s4 + $0x10] sm:$0xf]
    %v2260 = vld [vmem:[%s4 + $0x14] sm:$0xf]
    %v2261 = vld [vmem:[%s4 + $0x18] sm:$0xf]
    %v2262 = vld [vmem:[%s4 + $0x1c] sm:$0xf]
    %v2263 = vld [vmem:[%s4 + $0x20] sm:$0xf]
    %v2264 = vld [vmem:[%s4 + $0x24] sm:$0xf]
    %v2265 = vld [vmem:[%s4 + $0x28] sm:$0xf]
    %v2266 = vld [vmem:[%s4 + $0x2c] sm:$0xf]
    %v2267 = vld [vmem:[%s4 + $0x30] sm:$0xf]
    %v2268 = vld [vmem:[%s4 + $0x34] sm:$0xf]
    %v2269 = vld [vmem:[%s4 + $0x38] sm:$0xf]
    %v2270 = vld [vmem:[%s4 + $0x3c] sm:$0xf]
    %v2271 = vld [vmem:[#allocation4 + $0x7] sm:$0x1]
    %v2273 = vperm.slane %v2271, 0
    %v2291 = vunpack.c.l.b16 %v2255
    %v2292 = vunpack.c.l.b16 %v2256
    %v2293 = vunpack.c.l.b16 %v2257
    %v2294 = vunpack.c.l.b16 %v2258
    %v2295 = vunpack.c.l.b16 %v2259
    %v2296 = vunpack.c.l.b16 %v2260
    %v2297 = vunpack.c.l.b16 %v2261
    %v2298 = vunpack.c.l.b16 %v2262
    %v2299 = vunpack.c.l.b16 %v2263
    %v2300 = vunpack.c.l.b16 %v2264
    %v2301 = vunpack.c.l.b16 %v2265
    %v2302 = vunpack.c.l.b16 %v2266
    %v2303 = vunpack.c.l.b16 %v2267
    %v2304 = vunpack.c.l.b16 %v2268
    %v2305 = vunpack.c.l.b16 %v2269
    %v2306 = vunpack.c.l.b16 %v2270
    %v2307 = vpack.c.b16 %v2292, %v2291
    %v2308 = vpack.c.b16 %v2294, %v2293
    %v2309 = vpack.c.b16 %v2296, %v2295
    %v2310 = vpack.c.b16 %v2298, %v2297
    %v2311 = vpack.c.b16 %v2300, %v2299
    %v2312 = vpack.c.b16 %v2302, %v2301
    %v2313 = vpack.c.b16 %v2304, %v2303
    %v2314 = vpack.c.b16 %v2306, %v2305
    %2323 = vmatpush.bf16.msra.mxu0 %v2314
    %2324 = vmatpush.bf16.msra.mxu0 %v2313
    %2325 = vmatpush.bf16.msra.mxu0 %v2312
    %2326 = vmatpush.bf16.msra.mxu0 %v2311
    %2327 = vmatpush.bf16.msra.mxu0 %v2310
    %2328 = vmatpush.bf16.msra.mxu0 %v2309
    %2329 = vmatpush.bf16.msra.mxu0 %v2308
    %2330 = vmatpush.bf16.msra.mxu0 %v2307
    %2331 = vmatmul.bf16.gmra.mxu0 %v2254
    %v2332 = vpop.f32.mrf.mxu0
    %v2333 = vadd.f32 %v2273, %v2332
    %v2334 = vpop.f32.mrf.mxu0
    %v2335 = vadd.f32 %v2273, %v2334
    %2336 = vdwg.mxu0
    %v2337 = vmax.f32 %v2333, 0.0
    %v2338 = vmax.f32 %v2335, 0.0
    %v2339 = vpack.c.bf16 %v2338, %v2337
    %v2340 = vld [vmem:[#allocation2] sm:$0xf]
    %v2341 = vld [vmem:[#allocation2 + $0x4] sm:$0xf]
    %v2342 = vld [vmem:[#allocation2 + $0x8] sm:$0xf]
    %v2343 = vld [vmem:[#allocation2 + $0xc] sm:$0xf]
    %v2344 = vld [vmem:[#allocation2 + $0x10] sm:$0xf]
    %v2345 = vld [vmem:[#allocation2 + $0x14] sm:$0xf]
    %v2346 = vld [vmem:[#allocation2 + $0x18] sm:$0xf]
    %v2347 = vld [vmem:[#allocation2 + $0x1c] sm:$0xf]
    %v2348 = vld [vmem:[#allocation2 + $0x20] sm:$0xf]
    %v2349 = vld [vmem:[#allocation2 + $0x24] sm:$0xf]
    %v2350 = vld [vmem:[#allocation2 + $0x28] sm:$0xf]
    %v2351 = vld [vmem:[#allocation2 + $0x2c] sm:$0xf]
    %v2352 = vld [vmem:[#allocation2 + $0x30] sm:$0xf]
    %v2353 = vld [vmem:[#allocation2 + $0x34] sm:$0xf]
    %v2354 = vld [vmem:[#allocation2 + $0x38] sm:$0xf]
    %v2355 = vld [vmem:[#allocation2 + $0x3c] sm:$0xf]
    %v2356 = vld [vmem:[#allocation4 + $0x8] sm:$0x1]
    %v2358 = vperm.slane %v2356, 0
    %v2376 = vunpack.c.l.b16 %v2340
    %v2377 = vunpack.c.l.b16 %v2341
    %v2378 = vunpack.c.l.b16 %v2342
    %v2379 = vunpack.c.l.b16 %v2343
    %v2380 = vunpack.c.l.b16 %v2344
    %v2381 = vunpack.c.l.b16 %v2345
    %v2382 = vunpack.c.l.b16 %v2346
    %v2383 = vunpack.c.l.b16 %v2347
    %v2384 = vunpack.c.l.b16 %v2348
    %v2385 = vunpack.c.l.b16 %v2349
    %v2386 = vunpack.c.l.b16 %v2350
    %v2387 = vunpack.c.l.b16 %v2351
    %v2388 = vunpack.c.l.b16 %v2352
    %v2389 = vunpack.c.l.b16 %v2353
    %v2390 = vunpack.c.l.b16 %v2354
    %v2391 = vunpack.c.l.b16 %v2355
    %v2392 = vpack.c.b16 %v2377, %v2376
    %v2393 = vpack.c.b16 %v2379, %v2378
    %v2394 = vpack.c.b16 %v2381, %v2380
    %v2395 = vpack.c.b16 %v2383, %v2382
    %v2396 = vpack.c.b16 %v2385, %v2384
    %v2397 = vpack.c.b16 %v2387, %v2386
    %v2398 = vpack.c.b16 %v2389, %v2388
    %v2399 = vpack.c.b16 %v2391, %v2390
    %2408 = vmatpush.bf16.msra.mxu0 %v2399
    %2409 = vmatpush.bf16.msra.mxu0 %v2398
    %2410 = vmatpush.bf16.msra.mxu0 %v2397
    %2411 = vmatpush.bf16.msra.mxu0 %v2396
    %2412 = vmatpush.bf16.msra.mxu0 %v2395
    %2413 = vmatpush.bf16.msra.mxu0 %v2394
    %2414 = vmatpush.bf16.msra.mxu0 %v2393
    %2415 = vmatpush.bf16.msra.mxu0 %v2392
    %2416 = vmatmul.bf16.gmra.mxu0 %v2339
    %v2417 = vpop.f32.mrf.mxu0
    %v2418 = vadd.f32 %v2358, %v2417
    %v2419 = vpop.f32.mrf.mxu0
    %v2420 = vadd.f32 %v2358, %v2419
    %2421 = vdwg.mxu0
    %2422 = vst [vmem:[%s7] sm:$0xff] %v2418
    %2423 = vst [vmem:[%s7 + $0x8] sm:$0xff] %v2420
    // Predicated region
    $region38: #{sn_mlp_forward.1} parent=1 // pred_check
      _
    $region39: #{sn_mlp_forward.1} parent=1 // pred_check_branch
      %2425 = sbr.rel (0) target = $region41
    $region40: #{sn_mlp_forward.1} parent=1 // pred_region
      _
    $region41: #{sn_mlp_forward.1} parent=1 // pred_fallthru
      _
    // Predicated region
    $region42: #{sn_mlp_forward.1} parent=1 // pred_check
      _
    $region43: #{sn_mlp_forward.1} parent=1 // pred_check_branch
      %2427 = sbr.rel (0) target = $region45
    $region44: #{sn_mlp_forward.1} parent=1 // pred_region
      _
    $region45: #{sn_mlp_forward.1} parent=1 // pred_fallthru
      _
    %2428 = vsyncpa [#allocation3], 1
    %2429 = vsyncpa [#allocation5], 1

</llo_original>
